<compile_context>
chip_gen: v6e
topology: v6e:2x2x1
jax: 0.10.0
libtpu: 0.0.40
codegen_flags: <defaults>
</compile_context>

<pallas_src>
import functools
import jax
import jax.numpy as jnp
from jax.experimental import pallas as pl
from jax.experimental.pallas import tpu as pltpu


def _vmem_limit_bytes():
    """~75% of physical VMEM: ~96 MiB on v5e/v6e (128 MiB), ~48 MiB on v7x (64 MiB)."""
    try:
        cap = pltpu.get_tpu_info().vmem_capacity_bytes
    except Exception:
        cap = 64 * 1024 * 1024
    return max(32 * 1024 * 1024, min(int(cap * 3 // 4), 110 * 1024 * 1024))


def _pick_tq(S):
    """Query-tile rows: full S for small sequences, else a large multiple of 8 dividing S."""
    if S <= 512:
        return S
    for cand in (512, 448, 384, 320, 256, 192, 128, 64, 32, 16, 8):
        if S % cand == 0:
            return cand
    return S


def encoder_layer_kernel(x_ref, wq_ref, bq_ref, wkv_ref, bkv_ref, wo_ref, bo_ref,
                         w1_ref, b1_ref, w2_ref, b2_ref,
                         g1_ref, be1_ref, g2_ref, be2_ref,
                         o_ref, k_sc, v_sc, *, nhead, tq, compute_dtype):
    cd = compute_dtype
    S, D = x_ref.shape                       # x block is the full (S, D) slab for this batch
    dh = D // nhead
    t = pl.program_id(1)                     # q-tile index ("arbitrary" axis)

    # ---- once per batch (q-tile 0): project K/V for the full sequence into VMEM scratch ----
    @pl.when(t == 0)
    def _():
        xs = x_ref[...].astype(cd)                                            # (S, D)
        kv = jnp.dot(xs, wkv_ref[...],
                     preferred_element_type=jnp.float32) + bkv_ref[...]       # (S, 2D) fp32
        k_sc[...] = kv[:, :D].reshape(S, nhead, dh).transpose(1, 0, 2).astype(cd)
        v_sc[...] = kv[:, D:].reshape(S, nhead, dh).transpose(1, 0, 2).astype(cd)

    # ---- per (TQ, D) query tile ----
    row0 = pl.multiple_of(t * tq, tq)
    x = x_ref[pl.ds(row0, tq), :].astype(jnp.float32)                         # fp32 residual copy

    # Q projection (1/sqrt(dh) already folded into wq_t / bq in prepare_params).
    q = jnp.dot(x.astype(cd), wq_ref[...],
                preferred_element_type=jnp.float32) + bq_ref[...]             # (TQ, D) fp32
    qh = q.reshape(tq, nhead, dh).transpose(1, 0, 2).astype(cd)               # (H, TQ, dh)

    # Batched attention against the full-sequence K/V held in scratch.
    s = jnp.einsum('hqd,hkd->hqk', qh, k_sc[...],
                   preferred_element_type=jnp.float32)                        # (H, TQ, S) fp32
    s = s - jnp.max(s, axis=-1, keepdims=True)
    p = jnp.exp(s)
    p = p * pl.reciprocal(jnp.sum(p, axis=-1, keepdims=True), approx=True)    # EUP vrcp
    ctx = jnp.einsum('hqk,hkd->hqd', p.astype(cd), v_sc[...],
                     preferred_element_type=jnp.float32)                      # (H, TQ, dh)
    attn = ctx.transpose(1, 0, 2).reshape(tq, D)                              # (TQ, D) fp32

    attn = jnp.dot(attn.astype(cd), wo_ref[...],
                   preferred_element_type=jnp.float32) + bo_ref[...]

    # ---- residual + LayerNorm1 (dropout1 = identity in eval) ----
    y = x + attn
    mu = jnp.mean(y, axis=-1, keepdims=True)
    yc = y - mu
    var = jnp.mean(yc * yc, axis=-1, keepdims=True)
    y = yc * jax.lax.rsqrt(var + 1e-5) * g1_ref[...] + be1_ref[...]

    # ---- feed-forward (relu); dropout = identity in eval ----
    h = jnp.dot(y.astype(cd), w1_ref[...],
                preferred_element_type=jnp.float32) + b1_ref[...]             # (TQ, F) fp32
    h = jnp.maximum(h, 0.0)
    ff = jnp.dot(h.astype(cd), w2_ref[...],
                 preferred_element_type=jnp.float32) + b2_ref[...]

    # ---- residual + LayerNorm2 ----
    z = y + ff
    mu2 = jnp.mean(z, axis=-1, keepdims=True)
    zc = z - mu2
    var2 = jnp.mean(zc * zc, axis=-1, keepdims=True)
    z = zc * jax.lax.rsqrt(var2 + 1e-5) * g2_ref[...] + be2_ref[...]

    o_ref[...] = z.astype(o_ref.dtype)


def prepare_params(params, nhead, compute_dtype=jnp.float32):
    """One-time weight prep: split QKV, fold 1/sqrt(dh) into Q, transpose, cast."""
    cd = compute_dtype
    f32 = jnp.float32
    wqkv = jnp.asarray(params['wqkv'], f32)          # (3D, D) — PyTorch in_proj_weight
    bqkv = jnp.asarray(params['bqkv'], f32)          # (3D,)
    D = wqkv.shape[1]
    dh = D // nhead
    scale = f32(1.0 / (dh ** 0.5))
    return {
        'wq_t':  (wqkv[:D, :].T * scale).astype(cd),       # (D, D), scale folded in
        'bq':    (bqkv[:D] * scale)[None, :].astype(f32),
        'wkv_t': wqkv[D:, :].T.astype(cd),                 # (D, 2D)
        'bkv':   bqkv[D:][None, :].astype(f32),
        'wo_t':  jnp.asarray(params['wo'], f32).T.astype(cd),
        'bo':    jnp.asarray(params['bo'], f32)[None, :],
        'w1_t':  jnp.asarray(params['w1'], f32).T.astype(cd),   # (D, F)
        'b1':    jnp.asarray(params['b1'], f32)[None, :],
        'w2_t':  jnp.asarray(params['w2'], f32).T.astype(cd),   # (F, D)
        'b2':    jnp.asarray(params['b2'], f32)[None, :],
        'g1':    jnp.asarray(params['g1'], f32)[None, :],
        'be1':   jnp.asarray(params['be1'], f32)[None, :],
        'g2':    jnp.asarray(params['g2'], f32)[None, :],
        'be2':   jnp.asarray(params['be2'], f32)[None, :],
    }


def transformer_encoder_layer(src, prep, nhead, tq=None):
    """src: (S, B, D) — PyTorch nn.MultiheadAttention layout."""
    S, B, D = src.shape
    assert D % nhead == 0, "d_model must be divisible by nhead"
    if tq is None:
        tq = _pick_tq(S)
    assert S % tq == 0, "seq length must be divisible by the query tile"
    nt = S // tq
    compute_dtype = prep['wq_t'].dtype
    dh = D // nhead

    kernel = functools.partial(encoder_layer_kernel, nhead=nhead, tq=tq,
                               compute_dtype=compute_dtype)

    weight_order = ['wq_t', 'bq', 'wkv_t', 'bkv', 'wo_t', 'bo',
                    'w1_t', 'b1', 'w2_t', 'b2', 'g1', 'be1', 'g2', 'be2']
    weights = [prep[k] for k in weight_order]

    # One-time layout change so activation tiles are dense (TQ, D) slabs.
    src_bsd = jnp.transpose(src, (1, 0, 2))          # (B, S, D)

    out_bsd = pl.pallas_call(
        kernel,
        out_shape=jax.ShapeDtypeStruct((B, S, D), src.dtype),
        grid=(B, nt),
        in_specs=[
            # Full-sequence activation slab per batch; grid-invariant along the
            # q-tile axis so it is DMA'd once per batch.
            pl.BlockSpec((pl.Squeezed(), S, D), lambda b, t: (b, 0, 0)),
        ] + [
            # Weights never change across the grid -> single-buffered.
            pl.BlockSpec(w.shape, lambda b, t: (0, 0),
                         pipeline_mode=pl.Buffered(1))
            for w in weights
        ],
        out_specs=pl.BlockSpec((pl.Squeezed(), tq, D), lambda b, t: (b, t, 0)),
        scratch_shapes=[
            pltpu.VMEM((nhead, S, dh), compute_dtype),   # K (head-major), per-batch
            pltpu.VMEM((nhead, S, dh), compute_dtype),   # V (head-major), per-batch
        ],
        compiler_params=pltpu.CompilerParams(
            # q-tile axis must be "arbitrary": K/V scratch is filled at t == 0.
            dimension_semantics=("parallel", "arbitrary"),
            vmem_limit_bytes=_vmem_limit_bytes()),
    )(src_bsd, *weights)
    return jnp.transpose(out_bsd, (1, 0, 2))


# ----------------- pure-JAX reference (for correctness check) -----------------
def _layer_norm(x, g, b, eps=1e-5):
    mu = jnp.mean(x, axis=-1, keepdims=True)
    var = jnp.mean((x - mu) ** 2, axis=-1, keepdims=True)
    return (x - mu) * jax.lax.rsqrt(var + eps) * g + b


def reference_layer(src, params, nhead):
    S, B, D = src.shape
    dh = D // nhead

    def per_batch(x):  # x: (S, D)
        qkv = x @ params['wqkv'].T + params['bqkv']
        q, k, v = jnp.split(qkv, 3, axis=-1)
        q = q * (dh ** -0.5)
        qh = q.reshape(S, nhead, dh).transpose(1, 0, 2)
        kh = k.reshape(S, nhead, dh).transpose(1, 0, 2)
        vh = v.reshape(S, nhead, dh).transpose(1, 0, 2)
        s = jnp.einsum('hqd,hkd->hqk', qh, kh)
        p = jax.nn.softmax(s, axis=-1)
        o = jnp.einsum('hqk,hkd->hqd', p, vh).transpose(1, 0, 2).reshape(S, D)
        attn = o @ params['wo'].T + params['bo']
        y = _layer_norm(x + attn, params['g1'], params['be1'])
        ff = jax.nn.relu(y @ params['w1'].T + params['b1']) @ params['w2'].T + params['b2']
        return _layer_norm(y + ff, params['g2'], params['be2'])

    xb = jnp.transpose(src, (1, 0, 2))
    return jnp.transpose(jax.vmap(per_batch)(xb), (1, 0, 2))


# --------------------------------- main ---------------------------------
if __name__ == "__main__":
    S, B, D = 8, 2, 32          # seq, batch, d_model
    NHEAD = 4
    FDIM = 64                   # dim_feedforward (small for the test)

    key = jax.random.PRNGKey(0)
    ks = jax.random.split(key, 8)
    params = {
        'wqkv': 0.1 * jax.random.normal(ks[0], (3 * D, D), jnp.float32),
        'bqkv': 0.05 * jax.random.normal(ks[1], (3 * D,), jnp.float32),
        'wo':   0.1 * jax.random.normal(ks[2], (D, D), jnp.float32),
        'bo':   0.05 * jax.random.normal(ks[3], (D,), jnp.float32),
        'w1':   0.1 * jax.random.normal(ks[4], (FDIM, D), jnp.float32),
        'b1':   0.05 * jax.random.normal(ks[5], (FDIM,), jnp.float32),
        'w2':   0.1 * jax.random.normal(ks[6], (D, FDIM), jnp.float32),
        'b2':   0.05 * jax.random.normal(ks[7], (D,), jnp.float32),
        'g1':   jnp.ones((D,), jnp.float32),
        'be1':  jnp.zeros((D,), jnp.float32),
        'g2':   jnp.ones((D,), jnp.float32),
        'be2':  jnp.zeros((D,), jnp.float32),
    }

    src = jax.random.normal(jax.random.PRNGKey(42), (S, B, D), jnp.float32)
    ref = jax.block_until_ready(reference_layer(src, params, NHEAD))

    # fp32 compute path (approx EUP reciprocal in softmax -> tolerance ~1e-2)
    prep_f32 = prepare_params(params, NHEAD, jnp.float32)
    out = jax.block_until_ready(transformer_encoder_layer(src, prep_f32, NHEAD))
    assert out.shape == (S, B, D)
    assert jnp.allclose(out, ref, atol=1e-2, rtol=1e-2), "fp32 mismatch vs reference"

    # bf16 matmul-operand path (fp32 accumulation + fp32 softmax/LN stats),
    # the fast MXU path on v5e/v6e/v7x.
    prep_bf16 = prepare_params(params, NHEAD, jnp.bfloat16)
    out_bf = jax.block_until_ready(transformer_encoder_layer(src, prep_bf16, NHEAD))
    assert jnp.allclose(out_bf, ref, atol=5e-2, rtol=5e-2), "bf16 mismatch vs reference"

    print("KERNEL_OK")
</pallas_src>

<mosaic_0001>
module attributes {stable_mosaic.version = 11 : i64} {
  func.func @encoder_layer_kernel(%arg0: i32, %arg1: i32, %arg2: memref<1x8x32xf32, #tpu.memory_space<vmem>>, %arg3: memref<32x32xf32, #tpu.memory_space<vmem>>, %arg4: memref<1x32xf32, #tpu.memory_space<vmem>>, %arg5: memref<32x64xf32, #tpu.memory_space<vmem>>, %arg6: memref<1x64xf32, #tpu.memory_space<vmem>>, %arg7: memref<32x32xf32, #tpu.memory_space<vmem>>, %arg8: memref<1x32xf32, #tpu.memory_space<vmem>>, %arg9: memref<32x64xf32, #tpu.memory_space<vmem>>, %arg10: memref<1x64xf32, #tpu.memory_space<vmem>>, %arg11: memref<64x32xf32, #tpu.memory_space<vmem>>, %arg12: memref<1x32xf32, #tpu.memory_space<vmem>>, %arg13: memref<1x32xf32, #tpu.memory_space<vmem>>, %arg14: memref<1x32xf32, #tpu.memory_space<vmem>>, %arg15: memref<1x32xf32, #tpu.memory_space<vmem>>, %arg16: memref<1x32xf32, #tpu.memory_space<vmem>>, %arg17: memref<1x8x32xf32, #tpu.memory_space<vmem>>, %arg18: memref<4x8x8xf32, #tpu.memory_space<vmem>>, %arg19: memref<4x8x8xf32, #tpu.memory_space<vmem>>) attributes {dimension_semantics = [#tpu.dimension_semantics<parallel>, #tpu.dimension_semantics<arbitrary>], iteration_bounds = array<i64: 2, 1>, scalar_prefetch = 0 : i64, scratch_operands = 2 : i64, tpu.core_type = #tpu.core_type<tc>, window_params = [{transform_indices = @transform_0, window_bounds = array<i64: 1, 8, 32>}, {pipeline_mode = #tpu.pipeline_mode<synchronous>, transform_indices = @transform_1, window_bounds = array<i64: 32, 32>}, {pipeline_mode = #tpu.pipeline_mode<synchronous>, transform_indices = @transform_2, window_bounds = array<i64: 1, 32>}, {pipeline_mode = #tpu.pipeline_mode<synchronous>, transform_indices = @transform_3, window_bounds = array<i64: 32, 64>}, {pipeline_mode = #tpu.pipeline_mode<synchronous>, transform_indices = @transform_4, window_bounds = array<i64: 1, 64>}, {pipeline_mode = #tpu.pipeline_mode<synchronous>, transform_indices = @transform_5, window_bounds = array<i64: 32, 32>}, {pipeline_mode = #tpu.pipeline_mode<synchronous>, transform_indices = @transform_6, window_bounds = array<i64: 1, 32>}, {pipeline_mode = #tpu.pipeline_mode<synchronous>, transform_indices = @transform_7, window_bounds = array<i64: 32, 64>}, {pipeline_mode = #tpu.pipeline_mode<synchronous>, transform_indices = @transform_8, window_bounds = array<i64: 1, 64>}, {pipeline_mode = #tpu.pipeline_mode<synchronous>, transform_indices = @transform_9, window_bounds = array<i64: 64, 32>}, {pipeline_mode = #tpu.pipeline_mode<synchronous>, transform_indices = @transform_10, window_bounds = array<i64: 1, 32>}, {pipeline_mode = #tpu.pipeline_mode<synchronous>, transform_indices = @transform_11, window_bounds = array<i64: 1, 32>}, {pipeline_mode = #tpu.pipeline_mode<synchronous>, transform_indices = @transform_12, window_bounds = array<i64: 1, 32>}, {pipeline_mode = #tpu.pipeline_mode<synchronous>, transform_indices = @transform_13, window_bounds = array<i64: 1, 32>}, {pipeline_mode = #tpu.pipeline_mode<synchronous>, transform_indices = @transform_14, window_bounds = array<i64: 1, 32>}, {transform_indices = @transform_15, window_bounds = array<i64: 1, 8, 32>}]} {
    %c0_i32 = arith.constant 0 : i32
    %0 = arith.cmpi eq, %arg1, %c0_i32 : i32
    %1 = arith.extui %0 : i1 to i32
    %c0_i32_0 = arith.constant 0 : i32
    %2 = arith.cmpi ne, %1, %c0_i32_0 : i32
    scf.if %2 {
      %c0_53 = arith.constant 0 : index
      %c0_54 = arith.constant 0 : index
      %c0_55 = arith.constant 0 : index
      %97 = vector.load %arg2[%c0_53, %c0_54, %c0_55] : memref<1x8x32xf32, #tpu.memory_space<vmem>>, vector<1x8x32xf32>
      %98 = vector.shape_cast %97 : vector<1x8x32xf32> to vector<8x32xf32>
      %c0_56 = arith.constant 0 : index
      %c0_57 = arith.constant 0 : index
      %99 = vector.load %arg5[%c0_56, %c0_57] : memref<32x64xf32, #tpu.memory_space<vmem>>, vector<32x64xf32>
      %cst_58 = arith.constant dense<0.000000e+00> : vector<8x64xf32>
      %100 = tpu.matmul %98, %99, %cst_58 {dimension_numbers = #tpu.dot_dimension_numbers<[1], [0], [0], [1], [0, 0, 1, 1], [], []>} : vector<8x32xf32>, vector<32x64xf32>, vector<8x64xf32> -> vector<8x64xf32>
      %c0_59 = arith.constant 0 : index
      %c0_60 = arith.constant 0 : index
      %101 = vector.load %arg6[%c0_59, %c0_60] : memref<1x64xf32, #tpu.memory_space<vmem>>, vector<1x64xf32>
      %102 = vector.broadcast %101 : vector<1x64xf32> to vector<8x64xf32>
      %103 = arith.addf %100, %102 : vector<8x64xf32>
      %104 = vector.extract_strided_slice %103 {offsets = [0, 0], sizes = [8, 32], strides = [1, 1]} : vector<8x64xf32> to vector<8x32xf32>
      %105 = vector.shape_cast %104 : vector<8x32xf32> to vector<8x4x8xf32>
      %106 = tpu.transpose %105, [1, 0, 2] : vector<8x4x8xf32> -> vector<4x8x8xf32>
      %c0_61 = arith.constant 0 : index
      %c0_62 = arith.constant 0 : index
      %c0_63 = arith.constant 0 : index
      %107 = vector.load %arg18[%c0_61, %c0_62, %c0_63] : memref<4x8x8xf32, #tpu.memory_space<vmem>>, vector<4x8x8xf32>
      tpu.vector_store %arg18[%c0_61, %c0_62, %c0_63], %106 {strides = array<i32>} : memref<4x8x8xf32, #tpu.memory_space<vmem>>, vector<4x8x8xf32>,
      %108 = vector.extract_strided_slice %103 {offsets = [0, 32], sizes = [8, 32], strides = [1, 1]} : vector<8x64xf32> to vector<8x32xf32>
      %109 = vector.shape_cast %108 : vector<8x32xf32> to vector<8x4x8xf32>
      %110 = tpu.transpose %109, [1, 0, 2] : vector<8x4x8xf32> -> vector<4x8x8xf32>
      %c0_64 = arith.constant 0 : index
      %c0_65 = arith.constant 0 : index
      %c0_66 = arith.constant 0 : index
      %111 = vector.load %arg19[%c0_64, %c0_65, %c0_66] : memref<4x8x8xf32, #tpu.memory_space<vmem>>, vector<4x8x8xf32>
      tpu.vector_store %arg19[%c0_64, %c0_65, %c0_66], %110 {strides = array<i32>} : memref<4x8x8xf32, #tpu.memory_space<vmem>>, vector<4x8x8xf32>,
    } else {
    }
    %c8_i32 = arith.constant 8 : i32
    %3 = arith.muli %arg1, %c8_i32 : i32
    %4 = tpu.assume_multiple %3, 8 : i32
    %c0 = arith.constant 0 : index
    %5 = arith.index_cast %4 : i32 to index
    %c0_1 = arith.constant 0 : index
    %6 = vector.load %arg2[%c0, %5, %c0_1] : memref<1x8x32xf32, #tpu.memory_space<vmem>>, vector<1x8x32xf32>
    %7 = vector.shape_cast %6 : vector<1x8x32xf32> to vector<8x32xf32>
    %c0_2 = arith.constant 0 : index
    %c0_3 = arith.constant 0 : index
    %8 = vector.load %arg3[%c0_2, %c0_3] : memref<32x32xf32, #tpu.memory_space<vmem>>, vector<32x32xf32>
    %cst = arith.constant dense<0.000000e+00> : vector<8x32xf32>
    %9 = tpu.matmul %7, %8, %cst {dimension_numbers = #tpu.dot_dimension_numbers<[1], [0], [0], [1], [0, 0, 1, 1], [], []>} : vector<8x32xf32>, vector<32x32xf32>, vector<8x32xf32> -> vector<8x32xf32>
    %c0_4 = arith.constant 0 : index
    %c0_5 = arith.constant 0 : index
    %10 = vector.load %arg4[%c0_4, %c0_5] : memref<1x32xf32, #tpu.memory_space<vmem>>, vector<1x32xf32>
    %11 = vector.broadcast %10 : vector<1x32xf32> to vector<8x32xf32>
    %12 = arith.addf %9, %11 : vector<8x32xf32>
    %13 = vector.shape_cast %12 : vector<8x32xf32> to vector<8x4x8xf32>
    %14 = tpu.transpose %13, [1, 0, 2] : vector<8x4x8xf32> -> vector<4x8x8xf32>
    %c0_6 = arith.constant 0 : index
    %c0_7 = arith.constant 0 : index
    %c0_8 = arith.constant 0 : index
    %15 = vector.load %arg18[%c0_6, %c0_7, %c0_8] : memref<4x8x8xf32, #tpu.memory_space<vmem>>, vector<4x8x8xf32>
    "tpu.trace_start"() <{level = 10 : i32, message = "hqd,hkd->hqk"}> : () -> ()
    %cst_9 = arith.constant dense<0.000000e+00> : vector<4x8x8xf32>
    %16 = tpu.matmul %14, %15, %cst_9 {dimension_numbers = #tpu.dot_dimension_numbers<[2], [2], [1], [1], [0, 0, 0, 1, 1, 1], [0], [0]>} : vector<4x8x8xf32>, vector<4x8x8xf32>, vector<4x8x8xf32> -> vector<4x8x8xf32>
    "tpu.trace_stop"() : () -> ()
    %cst_10 = arith.constant dense<0xFF800000> : vector<4x8xf32>
    %17 = vector.multi_reduction <maximumf>, %16, %cst_10 [2] : vector<4x8x8xf32> to vector<4x8xf32>
    %18 = vector.shape_cast %17 : vector<4x8xf32> to vector<4x8x1xf32>
    %19 = vector.broadcast %18 : vector<4x8x1xf32> to vector<4x8x8xf32>
    %20 = arith.subf %16, %19 : vector<4x8x8xf32>
    %21 = math.exp %20 : vector<4x8x8xf32>
    %cst_11 = arith.constant dense<0.000000e+00> : vector<4x8xf32>
    %22 = vector.multi_reduction <add>, %21, %cst_11 [2] : vector<4x8x8xf32> to vector<4x8xf32>
    %23 = vector.shape_cast %22 : vector<4x8xf32> to vector<4x8x1xf32>
    %24 = tpu.reciprocal %23 {approx = true} : vector<4x8x1xf32> -> vector<4x8x1xf32>
    %25 = vector.broadcast %24 : vector<4x8x1xf32> to vector<4x8x8xf32>
    %26 = arith.mulf %21, %25 : vector<4x8x8xf32>
    %c0_12 = arith.constant 0 : index
    %c0_13 = arith.constant 0 : index
    %c0_14 = arith.constant 0 : index
    %27 = vector.load %arg19[%c0_12, %c0_13, %c0_14] : memref<4x8x8xf32, #tpu.memory_space<vmem>>, vector<4x8x8xf32>
    "tpu.trace_start"() <{level = 10 : i32, message = "hqk,hkd->hqd"}> : () -> ()
    %cst_15 = arith.constant dense<0.000000e+00> : vector<4x8x8xf32>
    %28 = tpu.matmul %26, %27, %cst_15 {dimension_numbers = #tpu.dot_dimension_numbers<[2], [1], [1], [2], [0, 0, 0, 1, 1, 2], [0], [0]>} : vector<4x8x8xf32>, vector<4x8x8xf32>, vector<4x8x8xf32> -> vector<4x8x8xf32>
    "tpu.trace_stop"() : () -> ()
    %29 = tpu.transpose %28, [1, 0, 2] : vector<4x8x8xf32> -> vector<8x4x8xf32>
    %30 = vector.shape_cast %29 : vector<8x4x8xf32> to vector<8x32xf32>
    %c0_16 = arith.constant 0 : index
    %c0_17 = arith.constant 0 : index
    %31 = vector.load %arg7[%c0_16, %c0_17] : memref<32x32xf32, #tpu.memory_space<vmem>>, vector<32x32xf32>
    %cst_18 = arith.constant dense<0.000000e+00> : vector<8x32xf32>
    %32 = tpu.matmul %30, %31, %cst_18 {dimension_numbers = #tpu.dot_dimension_numbers<[1], [0], [0], [1], [0, 0, 1, 1], [], []>} : vector<8x32xf32>, vector<32x32xf32>, vector<8x32xf32> -> vector<8x32xf32>
    %c0_19 = arith.constant 0 : index
    %c0_20 = arith.constant 0 : index
    %33 = vector.load %arg8[%c0_19, %c0_20] : memref<1x32xf32, #tpu.memory_space<vmem>>, vector<1x32xf32>
    %34 = vector.broadcast %33 : vector<1x32xf32> to vector<8x32xf32>
    %35 = arith.addf %32, %34 : vector<8x32xf32>
    %36 = arith.addf %7, %35 : vector<8x32xf32>
    %cst_21 = arith.constant dense<0.000000e+00> : vector<8xf32>
    %37 = vector.multi_reduction <add>, %36, %cst_21 [1] : vector<8x32xf32> to vector<8xf32>
    %38 = vector.shape_cast %37 : vector<8xf32> to vector<8x1xf32>
    %cst_22 = arith.constant 3.200000e+01 : f32
    %39 = vector.broadcast %cst_22 : f32 to vector<8x1xf32>
    %40 = arith.divf %38, %39 : vector<8x1xf32>
    %41 = vector.broadcast %40 : vector<8x1xf32> to vector<8x32xf32>
    %42 = arith.subf %36, %41 : vector<8x32xf32>
    %43 = arith.mulf %42, %42 : vector<8x32xf32>
    %cst_23 = arith.constant dense<0.000000e+00> : vector<8xf32>
    %44 = vector.multi_reduction <add>, %43, %cst_23 [1] : vector<8x32xf32> to vector<8xf32>
    %45 = vector.shape_cast %44 : vector<8xf32> to vector<8x1xf32>
    %cst_24 = arith.constant 3.200000e+01 : f32
    %46 = vector.broadcast %cst_24 : f32 to vector<8x1xf32>
    %47 = arith.divf %45, %46 : vector<8x1xf32>
    %cst_25 = arith.constant 9.99999974E-6 : f32
    %48 = vector.broadcast %cst_25 : f32 to vector<8x1xf32>
    %49 = arith.addf %47, %48 : vector<8x1xf32>
    %50 = math.rsqrt %49 : vector<8x1xf32>
    %51 = vector.broadcast %50 : vector<8x1xf32> to vector<8x32xf32>
    %52 = arith.mulf %42, %51 : vector<8x32xf32>
    %c0_26 = arith.constant 0 : index
    %c0_27 = arith.constant 0 : index
    %53 = vector.load %arg13[%c0_26, %c0_27] : memref<1x32xf32, #tpu.memory_space<vmem>>, vector<1x32xf32>
    %54 = vector.broadcast %53 : vector<1x32xf32> to vector<8x32xf32>
    %55 = arith.mulf %52, %54 : vector<8x32xf32>
    %c0_28 = arith.constant 0 : index
    %c0_29 = arith.constant 0 : index
    %56 = vector.load %arg14[%c0_28, %c0_29] : memref<1x32xf32, #tpu.memory_space<vmem>>, vector<1x32xf32>
    %57 = vector.broadcast %56 : vector<1x32xf32> to vector<8x32xf32>
    %58 = arith.addf %55, %57 : vector<8x32xf32>
    %c0_30 = arith.constant 0 : index
    %c0_31 = arith.constant 0 : index
    %59 = vector.load %arg9[%c0_30, %c0_31] : memref<32x64xf32, #tpu.memory_space<vmem>>, vector<32x64xf32>
    %cst_32 = arith.constant dense<0.000000e+00> : vector<8x64xf32>
    %60 = tpu.matmul %58, %59, %cst_32 {dimension_numbers = #tpu.dot_dimension_numbers<[1], [0], [0], [1], [0, 0, 1, 1], [], []>} : vector<8x32xf32>, vector<32x64xf32>, vector<8x64xf32> -> vector<8x64xf32>
    %c0_33 = arith.constant 0 : index
    %c0_34 = arith.constant 0 : index
    %61 = vector.load %arg10[%c0_33, %c0_34] : memref<1x64xf32, #tpu.memory_space<vmem>>, vector<1x64xf32>
    %62 = vector.broadcast %61 : vector<1x64xf32> to vector<8x64xf32>
    %63 = arith.addf %60, %62 : vector<8x64xf32>
    %cst_35 = arith.constant 0.000000e+00 : f32
    %64 = vector.broadcast %cst_35 : f32 to vector<8x64xf32>
    %65 = arith.maximumf %63, %64 : vector<8x64xf32>
    %c0_36 = arith.constant 0 : index
    %c0_37 = arith.constant 0 : index
    %66 = vector.load %arg11[%c0_36, %c0_37] : memref<64x32xf32, #tpu.memory_space<vmem>>, vector<64x32xf32>
    %cst_38 = arith.constant dense<0.000000e+00> : vector<8x32xf32>
    %67 = tpu.matmul %65, %66, %cst_38 {dimension_numbers = #tpu.dot_dimension_numbers<[1], [0], [0], [1], [0, 0, 1, 1], [], []>} : vector<8x64xf32>, vector<64x32xf32>, vector<8x32xf32> -> vector<8x32xf32>
    %c0_39 = arith.constant 0 : index
    %c0_40 = arith.constant 0 : index
    %68 = vector.load %arg12[%c0_39, %c0_40] : memref<1x32xf32, #tpu.memory_space<vmem>>, vector<1x32xf32>
    %69 = vector.broadcast %68 : vector<1x32xf32> to vector<8x32xf32>
    %70 = arith.addf %67, %69 : vector<8x32xf32>
    %71 = arith.addf %58, %70 : vector<8x32xf32>
    %cst_41 = arith.constant dense<0.000000e+00> : vector<8xf32>
    %72 = vector.multi_reduction <add>, %71, %cst_41 [1] : vector<8x32xf32> to vector<8xf32>
    %73 = vector.shape_cast %72 : vector<8xf32> to vector<8x1xf32>
    %cst_42 = arith.constant 3.200000e+01 : f32
    %74 = vector.broadcast %cst_42 : f32 to vector<8x1xf32>
    %75 = arith.divf %73, %74 : vector<8x1xf32>
    %76 = vector.broadcast %75 : vector<8x1xf32> to vector<8x32xf32>
    %77 = arith.subf %71, %76 : vector<8x32xf32>
    %78 = arith.mulf %77, %77 : vector<8x32xf32>
    %cst_43 = arith.constant dense<0.000000e+00> : vector<8xf32>
    %79 = vector.multi_reduction <add>, %78, %cst_43 [1] : vector<8x32xf32> to vector<8xf32>
    %80 = vector.shape_cast %79 : vector<8xf32> to vector<8x1xf32>
    %cst_44 = arith.constant 3.200000e+01 : f32
    %81 = vector.broadcast %cst_44 : f32 to vector<8x1xf32>
    %82 = arith.divf %80, %81 : vector<8x1xf32>
    %cst_45 = arith.constant 9.99999974E-6 : f32
    %83 = vector.broadcast %cst_45 : f32 to vector<8x1xf32>
    %84 = arith.addf %82, %83 : vector<8x1xf32>
    %85 = math.rsqrt %84 : vector<8x1xf32>
    %86 = vector.broadcast %85 : vector<8x1xf32> to vector<8x32xf32>
    %87 = arith.mulf %77, %86 : vector<8x32xf32>
    %c0_46 = arith.constant 0 : index
    %c0_47 = arith.constant 0 : index
    %88 = vector.load %arg15[%c0_46, %c0_47] : memref<1x32xf32, #tpu.memory_space<vmem>>, vector<1x32xf32>
    %89 = vector.broadcast %88 : vector<1x32xf32> to vector<8x32xf32>
    %90 = arith.mulf %87, %89 : vector<8x32xf32>
    %c0_48 = arith.constant 0 : index
    %c0_49 = arith.constant 0 : index
    %91 = vector.load %arg16[%c0_48, %c0_49] : memref<1x32xf32, #tpu.memory_space<vmem>>, vector<1x32xf32>
    %92 = vector.broadcast %91 : vector<1x32xf32> to vector<8x32xf32>
    %93 = arith.addf %90, %92 : vector<8x32xf32>
    %c0_50 = arith.constant 0 : index
    %c0_51 = arith.constant 0 : index
    %c0_52 = arith.constant 0 : index
    %94 = vector.load %arg17[%c0_50, %c0_51, %c0_52] : memref<1x8x32xf32, #tpu.memory_space<vmem>>, vector<1x8x32xf32>
    %95 = vector.shape_cast %94 : vector<1x8x32xf32> to vector<8x32xf32>
    %96 = vector.shape_cast %93 : vector<8x32xf32> to vector<1x8x32xf32>
    tpu.vector_store %arg17[%c0_50, %c0_51, %c0_52], %96 {strides = array<i32>} : memref<1x8x32xf32, #tpu.memory_space<vmem>>, vector<1x8x32xf32>,
    return
  }
  func.func @transform_0(%arg0: i32, %arg1: i32) -> (i32, i32, i32) {
    %c0_i32 = arith.constant 0 : i32
    %c0_i32_0 = arith.constant 0 : i32
    %c0_i32_1 = arith.constant 0 : i32
    return %arg0, %c0_i32, %c0_i32_0 : i32, i32, i32
  }
  func.func @transform_1(%arg0: i32, %arg1: i32) -> (i32, i32) {
    %c0_i32 = arith.constant 0 : i32
    %c0_i32_0 = arith.constant 0 : i32
    %c0_i32_1 = arith.constant 0 : i32
    return %c0_i32, %c0_i32_0 : i32, i32
  }
  func.func @transform_2(%arg0: i32, %arg1: i32) -> (i32, i32) {
    %c0_i32 = arith.constant 0 : i32
    %c0_i32_0 = arith.constant 0 : i32
    %c0_i32_1 = arith.constant 0 : i32
    return %c0_i32, %c0_i32_0 : i32, i32
  }
  func.func @transform_3(%arg0: i32, %arg1: i32) -> (i32, i32) {
    %c0_i32 = arith.constant 0 : i32
    %c0_i32_0 = arith.constant 0 : i32
    %c0_i32_1 = arith.constant 0 : i32
    return %c0_i32, %c0_i32_0 : i32, i32
  }
  func.func @transform_4(%arg0: i32, %arg1: i32) -> (i32, i32) {
    %c0_i32 = arith.constant 0 : i32
    %c0_i32_0 = arith.constant 0 : i32
    %c0_i32_1 = arith.constant 0 : i32
    return %c0_i32, %c0_i32_0 : i32, i32
  }
  func.func @transform_5(%arg0: i32, %arg1: i32) -> (i32, i32) {
    %c0_i32 = arith.constant 0 : i32
    %c0_i32_0 = arith.constant 0 : i32
    %c0_i32_1 = arith.constant 0 : i32
    return %c0_i32, %c0_i32_0 : i32, i32
  }
  func.func @transform_6(%arg0: i32, %arg1: i32) -> (i32, i32) {
    %c0_i32 = arith.constant 0 : i32
    %c0_i32_0 = arith.constant 0 : i32
    %c0_i32_1 = arith.constant 0 : i32
    return %c0_i32, %c0_i32_0 : i32, i32
  }
  func.func @transform_7(%arg0: i32, %arg1: i32) -> (i32, i32) {
    %c0_i32 = arith.constant 0 : i32
    %c0_i32_0 = arith.constant 0 : i32
    %c0_i32_1 = arith.constant 0 : i32
    return %c0_i32, %c0_i32_0 : i32, i32
  }
  func.func @transform_8(%arg0: i32, %arg1: i32) -> (i32, i32) {
    %c0_i32 = arith.constant 0 : i32
    %c0_i32_0 = arith.constant 0 : i32
    %c0_i32_1 = arith.constant 0 : i32
    return %c0_i32, %c0_i32_0 : i32, i32
  }
  func.func @transform_9(%arg0: i32, %arg1: i32) -> (i32, i32) {
    %c0_i32 = arith.constant 0 : i32
    %c0_i32_0 = arith.constant 0 : i32
    %c0_i32_1 = arith.constant 0 : i32
    return %c0_i32, %c0_i32_0 : i32, i32
  }
  func.func @transform_10(%arg0: i32, %arg1: i32) -> (i32, i32) {
    %c0_i32 = arith.constant 0 : i32
    %c0_i32_0 = arith.constant 0 : i32
    %c0_i32_1 = arith.constant 0 : i32
    return %c0_i32, %c0_i32_0 : i32, i32
  }
  func.func @transform_11(%arg0: i32, %arg1: i32) -> (i32, i32) {
    %c0_i32 = arith.constant 0 : i32
    %c0_i32_0 = arith.constant 0 : i32
    %c0_i32_1 = arith.constant 0 : i32
    return %c0_i32, %c0_i32_0 : i32, i32
  }
  func.func @transform_12(%arg0: i32, %arg1: i32) -> (i32, i32) {
    %c0_i32 = arith.constant 0 : i32
    %c0_i32_0 = arith.constant 0 : i32
    %c0_i32_1 = arith.constant 0 : i32
    return %c0_i32, %c0_i32_0 : i32, i32
  }
  func.func @transform_13(%arg0: i32, %arg1: i32) -> (i32, i32) {
    %c0_i32 = arith.constant 0 : i32
    %c0_i32_0 = arith.constant 0 : i32
    %c0_i32_1 = arith.constant 0 : i32
    return %c0_i32, %c0_i32_0 : i32, i32
  }
  func.func @transform_14(%arg0: i32, %arg1: i32) -> (i32, i32) {
    %c0_i32 = arith.constant 0 : i32
    %c0_i32_0 = arith.constant 0 : i32
    %c0_i32_1 = arith.constant 0 : i32
    return %c0_i32, %c0_i32_0 : i32, i32
  }
  func.func @transform_15(%arg0: i32, %arg1: i32) -> (i32, i32, i32) {
    %c0_i32 = arith.constant 0 : i32
    %c0_i32_0 = arith.constant 0 : i32
    return %arg0, %arg1, %c0_i32 : i32, i32, i32
  }
}

</mosaic_0001>

<llo_original>
// kernel: tpu_custom_call.1
$region0: #{tpu_custom_call.1}
  #allocation0 [shape = 'u32[]', space=smem, size = 0x4, offset = 0x4, fixed_abs, tag = 'smem constant byte address 0x4 - core index']
  #allocation1 [shape = 'u32[144,128]{1,0:T(1,128)}', space=vmem, size = 0x12000, scoped, tag = 'internal scratch']
  #allocation2 [shape = 'f32[4,8,8]{2,1,0:T(8,128)}', space=vmem, size = 0x4000, scoped, tag = 'scratch operand']
  #allocation3 [shape = 'f32[4,8,8]{2,1,0:T(8,128)}', space=vmem, size = 0x4000, scoped, tag = 'scratch operand']
  %s0 = inlined_call_operand.hbm [shape: f32[2,8,32], index: 0, kind: input, shape index: {}]
  %s1 = inlined_call_operand.vmem [shape: f32[32,32], index: 1, kind: input, shape index: {}]
  %s2 = inlined_call_operand.vmem [shape: f32[1,32], index: 2, kind: input, shape index: {}]
  %s3 = inlined_call_operand.vmem [shape: f32[32,64], index: 3, kind: input, shape index: {}]
  %s4 = inlined_call_operand.vmem [shape: f32[1,64], index: 4, kind: input, shape index: {}]
  %s5 = inlined_call_operand.vmem [shape: f32[32,32], index: 5, kind: input, shape index: {}]
  %s6 = inlined_call_operand.vmem [shape: f32[1,32], index: 6, kind: input, shape index: {}]
  %s7 = inlined_call_operand.hbm [shape: f32[32,64], index: 7, kind: input, shape index: {}]
  %s8 = inlined_call_operand.vmem [shape: f32[1,64], index: 8, kind: input, shape index: {}]
  %s9 = inlined_call_operand.vmem [shape: f32[64,32], index: 9, kind: input, shape index: {}]
  %s10 = inlined_call_operand.vmem [shape: f32[1,32], index: 10, kind: input, shape index: {}]
  %s11 = inlined_call_operand.vmem [shape: f32[1,32], index: 11, kind: input, shape index: {}]
  %s12 = inlined_call_operand.vmem [shape: f32[1,32], index: 12, kind: input, shape index: {}]
  %s13 = inlined_call_operand.vmem [shape: f32[1,32], index: 13, kind: input, shape index: {}]
  %s14 = inlined_call_operand.vmem [shape: f32[1,32], index: 14, kind: input, shape index: {}]
  %s15 = inlined_call_operand.hbm [shape: f32[2,8,32], index: 15, kind: output, shape index: {}]
  %s16 = sld [smem:[#allocation0]]
  $region105: #{tpu_custom_call.1} parent=0
    _
  %s18 = ssub.s32 1, %s16
  %s19 = scalar_select 0, %s18, %s16
  $region1: #{tpu_custom_call.1} parent=0
    #allocation4 [shape = 'u8[8192]{0}', space=vmem, size = 0x2000, scoped, tag = 'input window, operand 0']
    #allocation5 [shape = 's32[2]{0}', space=sflag, size = 0x8, scoped, tag = 'scoped memory for tpu_custom_call.1']
    #allocation6 [shape = 's32[2]{0}', space=sflag, size = 0x8, scoped, tag = 'scoped memory for tpu_custom_call.1']
    #allocation7 [shape = 'u8[16384]{0}', space=vmem, size = 0x4000, scoped, tag = 'input window, operand 7, single buffered']
    #allocation8 [shape = 's32[1]{0}', space=sflag, size = 0x4, scoped, tag = 'scoped memory for tpu_custom_call.1']
    #allocation9 [shape = 'u8[8192]{0}', space=vmem, size = 0x2000, scoped, tag = 'output window, operand 0']
    %20 = vsyncpa [#allocation5], 0
    %s21 = scalar_lea.sflag [#allocation5], 1
    %22 = vsyncpa %s21, 0
    %23 = vsyncpa [#allocation8], 0
    %24 = vsyncpa [#allocation6], 0
    %s25 = scalar_lea.sflag [#allocation6], 1
    %26 = vsyncpa %s25, 0
    loop: start=0, step=1, limit=4
    $region2: #{tpu_custom_call.1} parent=1 // loop_pre_header
      _
    $region3: #{tpu_custom_call.1} parent=1 // loop_header
      %s28 = sphi 0, %s32
      %p29 = scmp.ge.s32.totalorder %s28, 4
      %s35 = sphi 0, %s47
      %s36 = sphi 0, %s43
      %s37 = sphi 0, %s35
      %s38 = sphi 0, %s36
      %s39 = sphi 0, %s37
      %s40 = sphi 0, %s38
      %s50 = sphi 0, %s52
      %s53 = sphi 0, %s50
      %s54 = sphi 0, %s53
      %s70 = sphi 0, %s54
      %s74 = sphi 0, %s74
      %s76 = sphi 0, %s74
      %s77 = sphi 0, %s76
      %s91 = sphi 0, %s77
      %s95 = sphi 0, %s95
      %s97 = sphi 0, %s95
      %s98 = sphi 0, %s97
      %s112 = sphi 0, %s98
      %s116 = sphi 0, %s116
      %s118 = sphi 0, %s116
      %s119 = sphi 0, %s118
      %s133 = sphi 0, %s119
      %s137 = sphi 0, %s137
      %s139 = sphi 0, %s137
      %s140 = sphi 0, %s139
      %s154 = sphi 0, %s140
      %s158 = sphi 0, %s158
      %s160 = sphi 0, %s158
      %s161 = sphi 0, %s160
      %s175 = sphi 0, %s161
      %s179 = sphi 0, %s179
      %s181 = sphi 0, %s179
      %s182 = sphi 0, %s181
      %s196 = sphi 0, %s182
      %s200 = sphi 0, %s200
      %s202 = sphi 0, %s200
      %s203 = sphi 0, %s202
      %s217 = sphi 0, %s203
      %s221 = sphi 0, %s221
      %s223 = sphi 0, %s221
      %s224 = sphi 0, %s223
      %s238 = sphi 0, %s224
      %s242 = sphi 0, %s242
      %s244 = sphi 0, %s242
      %s245 = sphi 0, %s244
      %s259 = sphi 0, %s245
      %s263 = sphi 0, %s263
      %s265 = sphi 0, %s263
      %s266 = sphi 0, %s265
      %s280 = sphi 0, %s266
      %s284 = sphi 0, %s284
      %s286 = sphi 0, %s284
      %s287 = sphi 0, %s286
      %s301 = sphi 0, %s287
      %s305 = sphi 0, %s305
      %s307 = sphi 0, %s305
      %s308 = sphi 0, %s307
      %s322 = sphi 0, %s308
      %s326 = sphi 0, %s326
      %s328 = sphi 0, %s326
      %s329 = sphi 0, %s328
      %s343 = sphi 0, %s329
      %s347 = sphi 0, %s347
      %s349 = sphi 0, %s347
      %s350 = sphi 0, %s349
      %s364 = sphi 0, %s350
      %s372 = sphi 0, %s374
      %s375 = sphi 0, %s372
      %s376 = sphi 0, %s375
      %s392 = sphi 0, %s376
    $region4: #{tpu_custom_call.1} parent=1 // loop_header_branch
      %31 = sbr.rel (%p29) target = $region8
    $region5: #{tpu_custom_call.1} parent=1 // loop_body
      %s33 = ssub.s32 %s28, 1
      %s34 = ssub.s32 %s28, 2
      %s41 = sadd.s32 1, %s36
      %p42 = scmp.ge.s32.totalorder %s41, 1
      %s43 = scalar_select %p42, 0, %s41
      %s44 = sadd.s32 1, %s35
      %s45 = scalar_select %p42, %s44, %s35
      %p46 = scmp.ge.s32.totalorder %s45, 2
      %s47 = scalar_select %p46, 0, %s45
      %s48 = ssub.s32 %s35, %s47
      %p49 = scmp.eq.s32.totalorder %s48, 0
      %s51 = sadd.s32 %s50, 1
      %s52 = scalar_select %p49, %s50, %s51
      %p55 = pneg %p49
      %p56 = scmp.eq.s32.totalorder %s28, 1
      %p57 = por %p55, %p56
      %p58 = scmp.ne.s32.totalorder %s50, %s53
      %p59 = scmp.eq.s32.totalorder %s28, 0
      %p60 = por %p58, %p59
      %p61 = scmp.ne.s32.totalorder %s50, %s53
      %p62 = scmp.eq.s32.totalorder %s33, 1
      %p63 = por %p61, %p62
      %p64 = scmp.ne.s32.totalorder %s53, %s54
      %p65 = scmp.eq.s32.totalorder %s33, 0
      %p66 = por %p64, %p65
      %p67 = scmp.ne.s32.totalorder %s53, %s54
      %p68 = scmp.eq.s32.totalorder %s34, 1
      %p69 = por %p67, %p68
      %p71 = scmp.ne.s32.totalorder %s54, %s70
      %p72 = scmp.eq.s32.totalorder %s34, 0
      %p73 = por %p71, %p72
      %s75 = sadd.s32 %s74, 1
      %p78 = scmp.eq.s32.totalorder %s28, 1
      %p79 = scmp.ne.s32.totalorder %s74, %s76
      %p80 = scmp.eq.s32.totalorder %s28, 0
      %p81 = por %p79, %p80
      %p82 = scmp.ne.s32.totalorder %s74, %s76
      %p83 = scmp.eq.s32.totalorder %s33, 1
      %p84 = por %p82, %p83
      %p85 = scmp.ne.s32.totalorder %s76, %s77
      %p86 = scmp.eq.s32.totalorder %s33, 0
      %p87 = por %p85, %p86
      %p88 = scmp.ne.s32.totalorder %s76, %s77
      %p89 = scmp.eq.s32.totalorder %s34, 1
      %p90 = por %p88, %p89
      %p92 = scmp.ne.s32.totalorder %s77, %s91
      %p93 = scmp.eq.s32.totalorder %s34, 0
      %p94 = por %p92, %p93
      %s96 = sadd.s32 %s95, 1
      %p99 = scmp.eq.s32.totalorder %s28, 1
      %p100 = scmp.ne.s32.totalorder %s95, %s97
      %p101 = scmp.eq.s32.totalorder %s28, 0
      %p102 = por %p100, %p101
      %p103 = scmp.ne.s32.totalorder %s95, %s97
      %p104 = scmp.eq.s32.totalorder %s33, 1
      %p105 = por %p103, %p104
      %p106 = scmp.ne.s32.totalorder %s97, %s98
      %p107 = scmp.eq.s32.totalorder %s33, 0
      %p108 = por %p106, %p107
      %p109 = scmp.ne.s32.totalorder %s97, %s98
      %p110 = scmp.eq.s32.totalorder %s34, 1
      %p111 = por %p109, %p110
      %p113 = scmp.ne.s32.totalorder %s98, %s112
      %p114 = scmp.eq.s32.totalorder %s34, 0
      %p115 = por %p113, %p114
      %s117 = sadd.s32 %s116, 1
      %p120 = scmp.eq.s32.totalorder %s28, 1
      %p121 = scmp.ne.s32.totalorder %s116, %s118
      %p122 = scmp.eq.s32.totalorder %s28, 0
      %p123 = por %p121, %p122
      %p124 = scmp.ne.s32.totalorder %s116, %s118
      %p125 = scmp.eq.s32.totalorder %s33, 1
      %p126 = por %p124, %p125
      %p127 = scmp.ne.s32.totalorder %s118, %s119
      %p128 = scmp.eq.s32.totalorder %s33, 0
      %p129 = por %p127, %p128
      %p130 = scmp.ne.s32.totalorder %s118, %s119
      %p131 = scmp.eq.s32.totalorder %s34, 1
      %p132 = por %p130, %p131
      %p134 = scmp.ne.s32.totalorder %s119, %s133
      %p135 = scmp.eq.s32.totalorder %s34, 0
      %p136 = por %p134, %p135
      %s138 = sadd.s32 %s137, 1
      %p141 = scmp.eq.s32.totalorder %s28, 1
      %p142 = scmp.ne.s32.totalorder %s137, %s139
      %p143 = scmp.eq.s32.totalorder %s28, 0
      %p144 = por %p142, %p143
      %p145 = scmp.ne.s32.totalorder %s137, %s139
      %p146 = scmp.eq.s32.totalorder %s33, 1
      %p147 = por %p145, %p146
      %p148 = scmp.ne.s32.totalorder %s139, %s140
      %p149 = scmp.eq.s32.totalorder %s33, 0
      %p150 = por %p148, %p149
      %p151 = scmp.ne.s32.totalorder %s139, %s140
      %p152 = scmp.eq.s32.totalorder %s34, 1
      %p153 = por %p151, %p152
      %p155 = scmp.ne.s32.totalorder %s140, %s154
      %p156 = scmp.eq.s32.totalorder %s34, 0
      %p157 = por %p155, %p156
      %s159 = sadd.s32 %s158, 1
      %p162 = scmp.eq.s32.totalorder %s28, 1
      %p163 = scmp.ne.s32.totalorder %s158, %s160
      %p164 = scmp.eq.s32.totalorder %s28, 0
      %p165 = por %p163, %p164
      %p166 = scmp.ne.s32.totalorder %s158, %s160
      %p167 = scmp.eq.s32.totalorder %s33, 1
      %p168 = por %p166, %p167
      %p169 = scmp.ne.s32.totalorder %s160, %s161
      %p170 = scmp.eq.s32.totalorder %s33, 0
      %p171 = por %p169, %p170
      %p172 = scmp.ne.s32.totalorder %s160, %s161
      %p173 = scmp.eq.s32.totalorder %s34, 1
      %p174 = por %p172, %p173
      %p176 = scmp.ne.s32.totalorder %s161, %s175
      %p177 = scmp.eq.s32.totalorder %s34, 0
      %p178 = por %p176, %p177
      %s180 = sadd.s32 %s179, 1
      %p183 = scmp.eq.s32.totalorder %s28, 1
      %p184 = scmp.ne.s32.totalorder %s179, %s181
      %p185 = scmp.eq.s32.totalorder %s28, 0
      %p186 = por %p184, %p185
      %p187 = scmp.ne.s32.totalorder %s179, %s181
      %p188 = scmp.eq.s32.totalorder %s33, 1
      %p189 = por %p187, %p188
      %p190 = scmp.ne.s32.totalorder %s181, %s182
      %p191 = scmp.eq.s32.totalorder %s33, 0
      %p192 = por %p190, %p191
      %p193 = scmp.ne.s32.totalorder %s181, %s182
      %p194 = scmp.eq.s32.totalorder %s34, 1
      %p195 = por %p193, %p194
      %p197 = scmp.ne.s32.totalorder %s182, %s196
      %p198 = scmp.eq.s32.totalorder %s34, 0
      %p199 = por %p197, %p198
      %s201 = sadd.s32 %s200, 1
      %p204 = scmp.eq.s32.totalorder %s28, 1
      %p205 = scmp.ne.s32.totalorder %s200, %s202
      %p206 = scmp.eq.s32.totalorder %s28, 0
      %p207 = por %p205, %p206
      %p208 = scmp.ne.s32.totalorder %s200, %s202
      %p209 = scmp.eq.s32.totalorder %s33, 1
      %p210 = por %p208, %p209
      %p211 = scmp.ne.s32.totalorder %s202, %s203
      %p212 = scmp.eq.s32.totalorder %s33, 0
      %p213 = por %p211, %p212
      %p214 = scmp.ne.s32.totalorder %s202, %s203
      %p215 = scmp.eq.s32.totalorder %s34, 1
      %p216 = por %p214, %p215
      %p218 = scmp.ne.s32.totalorder %s203, %s217
      %p219 = scmp.eq.s32.totalorder %s34, 0
      %p220 = por %p218, %p219
      %s222 = sadd.s32 %s221, 1
      %p225 = scmp.eq.s32.totalorder %s28, 1
      %p226 = scmp.ne.s32.totalorder %s221, %s223
      %p227 = scmp.eq.s32.totalorder %s28, 0
      %p228 = por %p226, %p227
      %p229 = scmp.ne.s32.totalorder %s221, %s223
      %p230 = scmp.eq.s32.totalorder %s33, 1
      %p231 = por %p229, %p230
      %p232 = scmp.ne.s32.totalorder %s223, %s224
      %p233 = scmp.eq.s32.totalorder %s33, 0
      %p234 = por %p232, %p233
      %p235 = scmp.ne.s32.totalorder %s223, %s224
      %p236 = scmp.eq.s32.totalorder %s34, 1
      %p237 = por %p235, %p236
      %p239 = scmp.ne.s32.totalorder %s224, %s238
      %p240 = scmp.eq.s32.totalorder %s34, 0
      %p241 = por %p239, %p240
      %s243 = sadd.s32 %s242, 1
      %p246 = scmp.eq.s32.totalorder %s28, 1
      %p247 = scmp.ne.s32.totalorder %s242, %s244
      %p248 = scmp.eq.s32.totalorder %s28, 0
      %p249 = por %p247, %p248
      %p250 = scmp.ne.s32.totalorder %s242, %s244
      %p251 = scmp.eq.s32.totalorder %s33, 1
      %p252 = por %p250, %p251
      %p253 = scmp.ne.s32.totalorder %s244, %s245
      %p254 = scmp.eq.s32.totalorder %s33, 0
      %p255 = por %p253, %p254
      %p256 = scmp.ne.s32.totalorder %s244, %s245
      %p257 = scmp.eq.s32.totalorder %s34, 1
      %p258 = por %p256, %p257
      %p260 = scmp.ne.s32.totalorder %s245, %s259
      %p261 = scmp.eq.s32.totalorder %s34, 0
      %p262 = por %p260, %p261
      %s264 = sadd.s32 %s263, 1
      %p267 = scmp.eq.s32.totalorder %s28, 1
      %p268 = scmp.ne.s32.totalorder %s263, %s265
      %p269 = scmp.eq.s32.totalorder %s28, 0
      %p270 = por %p268, %p269
      %p271 = scmp.ne.s32.totalorder %s263, %s265
      %p272 = scmp.eq.s32.totalorder %s33, 1
      %p273 = por %p271, %p272
      %p274 = scmp.ne.s32.totalorder %s265, %s266
      %p275 = scmp.eq.s32.totalorder %s33, 0
      %p276 = por %p274, %p275
      %p277 = scmp.ne.s32.totalorder %s265, %s266
      %p278 = scmp.eq.s32.totalorder %s34, 1
      %p279 = por %p277, %p278
      %p281 = scmp.ne.s32.totalorder %s266, %s280
      %p282 = scmp.eq.s32.totalorder %s34, 0
      %p283 = por %p281, %p282
      %s285 = sadd.s32 %s284, 1
      %p288 = scmp.eq.s32.totalorder %s28, 1
      %p289 = scmp.ne.s32.totalorder %s284, %s286
      %p290 = scmp.eq.s32.totalorder %s28, 0
      %p291 = por %p289, %p290
      %p292 = scmp.ne.s32.totalorder %s284, %s286
      %p293 = scmp.eq.s32.totalorder %s33, 1
      %p294 = por %p292, %p293
      %p295 = scmp.ne.s32.totalorder %s286, %s287
      %p296 = scmp.eq.s32.totalorder %s33, 0
      %p297 = por %p295, %p296
      %p298 = scmp.ne.s32.totalorder %s286, %s287
      %p299 = scmp.eq.s32.totalorder %s34, 1
      %p300 = por %p298, %p299
      %p302 = scmp.ne.s32.totalorder %s287, %s301
      %p303 = scmp.eq.s32.totalorder %s34, 0
      %p304 = por %p302, %p303
      %s306 = sadd.s32 %s305, 1
      %p309 = scmp.eq.s32.totalorder %s28, 1
      %p310 = scmp.ne.s32.totalorder %s305, %s307
      %p311 = scmp.eq.s32.totalorder %s28, 0
      %p312 = por %p310, %p311
      %p313 = scmp.ne.s32.totalorder %s305, %s307
      %p314 = scmp.eq.s32.totalorder %s33, 1
      %p315 = por %p313, %p314
      %p316 = scmp.ne.s32.totalorder %s307, %s308
      %p317 = scmp.eq.s32.totalorder %s33, 0
      %p318 = por %p316, %p317
      %p319 = scmp.ne.s32.totalorder %s307, %s308
      %p320 = scmp.eq.s32.totalorder %s34, 1
      %p321 = por %p319, %p320
      %p323 = scmp.ne.s32.totalorder %s308, %s322
      %p324 = scmp.eq.s32.totalorder %s34, 0
      %p325 = por %p323, %p324
      %s327 = sadd.s32 %s326, 1
      %p330 = scmp.eq.s32.totalorder %s28, 1
      %p331 = scmp.ne.s32.totalorder %s326, %s328
      %p332 = scmp.eq.s32.totalorder %s28, 0
      %p333 = por %p331, %p332
      %p334 = scmp.ne.s32.totalorder %s326, %s328
      %p335 = scmp.eq.s32.totalorder %s33, 1
      %p336 = por %p334, %p335
      %p337 = scmp.ne.s32.totalorder %s328, %s329
      %p338 = scmp.eq.s32.totalorder %s33, 0
      %p339 = por %p337, %p338
      %p340 = scmp.ne.s32.totalorder %s328, %s329
      %p341 = scmp.eq.s32.totalorder %s34, 1
      %p342 = por %p340, %p341
      %p344 = scmp.ne.s32.totalorder %s329, %s343
      %p345 = scmp.eq.s32.totalorder %s34, 0
      %p346 = por %p344, %p345
      %s348 = sadd.s32 %s347, 1
      %p351 = scmp.eq.s32.totalorder %s28, 1
      %p352 = scmp.ne.s32.totalorder %s347, %s349
      %p353 = scmp.eq.s32.totalorder %s28, 0
      %p354 = por %p352, %p353
      %p355 = scmp.ne.s32.totalorder %s347, %s349
      %p356 = scmp.eq.s32.totalorder %s33, 1
      %p357 = por %p355, %p356
      %p358 = scmp.ne.s32.totalorder %s349, %s350
      %p359 = scmp.eq.s32.totalorder %s33, 0
      %p360 = por %p358, %p359
      %p361 = scmp.ne.s32.totalorder %s349, %s350
      %p362 = scmp.eq.s32.totalorder %s34, 1
      %p363 = por %p361, %p362
      %p365 = scmp.ne.s32.totalorder %s350, %s364
      %p366 = scmp.eq.s32.totalorder %s34, 0
      %p367 = por %p365, %p366
      %s368 = ssub.s32 %s35, %s47
      %s369 = ssub.s32 %s36, %s43
      %s370 = sor.u32 %s368, %s369
      %p371 = scmp.eq.s32.totalorder %s370, 0
      %s373 = sadd.s32 %s372, 1
      %s374 = scalar_select %p371, %s372, %s373
      %p377 = pneg %p371
      %p378 = scmp.eq.s32.totalorder %s28, 1
      %p379 = por %p377, %p378
      %p380 = scmp.ne.s32.totalorder %s372, %s375
      %p381 = scmp.eq.s32.totalorder %s28, 0
      %p382 = por %p380, %p381
      %p383 = scmp.ne.s32.totalorder %s372, %s375
      %p384 = scmp.eq.s32.totalorder %s33, 1
      %p385 = por %p383, %p384
      %p386 = scmp.ne.s32.totalorder %s375, %s376
      %p387 = scmp.eq.s32.totalorder %s33, 0
      %p388 = por %p386, %p387
      %p389 = scmp.ne.s32.totalorder %s375, %s376
      %p390 = scmp.eq.s32.totalorder %s34, 1
      %p391 = por %p389, %p390
      %p393 = scmp.ne.s32.totalorder %s376, %s392
      %p394 = scmp.eq.s32.totalorder %s34, 0
      %p395 = por %p393, %p394
      %p396 = scmp.le.s32.totalorder 1, %s28
      %p397 = scmp.lt.s32.totalorder %s28, 3
      %p398 = pnand %p396, %p397
      %p399 = pneg %p398
      // Predicated region
      $region9: #{tpu_custom_call.1} parent=5 // pred_check
        _
      $region10: #{tpu_custom_call.1} parent=5 // pred_check_branch
        %401 = sbr.rel (%p398) target = $region12
      $region11: #{tpu_custom_call.1} parent=5 // pred_region
        %s402 = ssub.s32 %s28, 1
        // Predicated region
        $region13: #{tpu_custom_call.1} parent=11 // pred_check
          %p403 = pneg %p87
        $region14: #{tpu_custom_call.1} parent=11 // pred_check_branch
          %405 = sbr.rel (%p403) target = $region16
        $region15: #{tpu_custom_call.1} parent=11 // pred_region
          _
        $region16: #{tpu_custom_call.1} parent=11 // pred_fallthru
          _
        // Predicated region
        $region17: #{tpu_custom_call.1} parent=11 // pred_check
          %p406 = pneg %p108
        $region18: #{tpu_custom_call.1} parent=11 // pred_check_branch
          %408 = sbr.rel (%p406) target = $region20
        $region19: #{tpu_custom_call.1} parent=11 // pred_region
          _
        $region20: #{tpu_custom_call.1} parent=11 // pred_fallthru
          _
        // Predicated region
        $region21: #{tpu_custom_call.1} parent=11 // pred_check
          %p409 = pneg %p129
        $region22: #{tpu_custom_call.1} parent=11 // pred_check_branch
          %411 = sbr.rel (%p409) target = $region24
        $region23: #{tpu_custom_call.1} parent=11 // pred_region
          _
        $region24: #{tpu_custom_call.1} parent=11 // pred_fallthru
          _
        // Predicated region
        $region25: #{tpu_custom_call.1} parent=11 // pred_check
          %p412 = pneg %p150
        $region26: #{tpu_custom_call.1} parent=11 // pred_check_branch
          %414 = sbr.rel (%p412) target = $region28
        $region27: #{tpu_custom_call.1} parent=11 // pred_region
          _
        $region28: #{tpu_custom_call.1} parent=11 // pred_fallthru
          _
        // Predicated region
        $region29: #{tpu_custom_call.1} parent=11 // pred_check
          %p415 = pneg %p171
        $region30: #{tpu_custom_call.1} parent=11 // pred_check_branch
          %417 = sbr.rel (%p415) target = $region32
        $region31: #{tpu_custom_call.1} parent=11 // pred_region
          _
        $region32: #{tpu_custom_call.1} parent=11 // pred_fallthru
          _
        // Predicated region
        $region33: #{tpu_custom_call.1} parent=11 // pred_check
          %p418 = pneg %p192
        $region34: #{tpu_custom_call.1} parent=11 // pred_check_branch
          %420 = sbr.rel (%p418) target = $region36
        $region35: #{tpu_custom_call.1} parent=11 // pred_region
          _
        $region36: #{tpu_custom_call.1} parent=11 // pred_fallthru
          _
        // Predicated region
        $region37: #{tpu_custom_call.1} parent=11 // pred_check
          %p421 = pneg %p213
        $region38: #{tpu_custom_call.1} parent=11 // pred_check_branch
          %423 = sbr.rel (%p421) target = $region40
        $region39: #{tpu_custom_call.1} parent=11 // pred_region
          %s425 = ssub.s32 512, 512
          %426 = vsyncadd [#allocation8], %s425
          %s427 = sshll.u32 [#allocation7], 4
          %s428 = int_to_ptr.vmem [resolvable:$true] %s427
          %433 = dma.hbm_to_vmem [thread:$0]  %s7, 512, %s428, [#allocation8], 128, 128, 8
        $region40: #{tpu_custom_call.1} parent=11 // pred_fallthru
          _
        // Predicated region
        $region41: #{tpu_custom_call.1} parent=11 // pred_check
          %p434 = pneg %p234
        $region42: #{tpu_custom_call.1} parent=11 // pred_check_branch
          %436 = sbr.rel (%p434) target = $region44
        $region43: #{tpu_custom_call.1} parent=11 // pred_region
          _
        $region44: #{tpu_custom_call.1} parent=11 // pred_fallthru
          _
        // Predicated region
        $region45: #{tpu_custom_call.1} parent=11 // pred_check
          %p437 = pneg %p255
        $region46: #{tpu_custom_call.1} parent=11 // pred_check_branch
          %439 = sbr.rel (%p437) target = $region48
        $region47: #{tpu_custom_call.1} parent=11 // pred_region
          _
        $region48: #{tpu_custom_call.1} parent=11 // pred_fallthru
          _
        // Predicated region
        $region49: #{tpu_custom_call.1} parent=11 // pred_check
          %p440 = pneg %p276
        $region50: #{tpu_custom_call.1} parent=11 // pred_check_branch
          %442 = sbr.rel (%p440) target = $region52
        $region51: #{tpu_custom_call.1} parent=11 // pred_region
          _
        $region52: #{tpu_custom_call.1} parent=11 // pred_fallthru
          _
        // Predicated region
        $region53: #{tpu_custom_call.1} parent=11 // pred_check
          %p443 = pneg %p297
        $region54: #{tpu_custom_call.1} parent=11 // pred_check_branch
          %445 = sbr.rel (%p443) target = $region56
        $region55: #{tpu_custom_call.1} parent=11 // pred_region
          _
        $region56: #{tpu_custom_call.1} parent=11 // pred_fallthru
          _
        // Predicated region
        $region57: #{tpu_custom_call.1} parent=11 // pred_check
          %p446 = pneg %p318
        $region58: #{tpu_custom_call.1} parent=11 // pred_check_branch
          %448 = sbr.rel (%p446) target = $region60
        $region59: #{tpu_custom_call.1} parent=11 // pred_region
          _
        $region60: #{tpu_custom_call.1} parent=11 // pred_fallthru
          _
        // Predicated region
        $region61: #{tpu_custom_call.1} parent=11 // pred_check
          %p449 = pneg %p339
        $region62: #{tpu_custom_call.1} parent=11 // pred_check_branch
          %451 = sbr.rel (%p449) target = $region64
        $region63: #{tpu_custom_call.1} parent=11 // pred_region
          _
        $region64: #{tpu_custom_call.1} parent=11 // pred_fallthru
          _
        // Predicated region
        $region65: #{tpu_custom_call.1} parent=11 // pred_check
          %p452 = pneg %p360
        $region66: #{tpu_custom_call.1} parent=11 // pred_check_branch
          %454 = sbr.rel (%p452) target = $region68
        $region67: #{tpu_custom_call.1} parent=11 // pred_region
          _
        $region68: #{tpu_custom_call.1} parent=11 // pred_fallthru
          _
      $region12: #{tpu_custom_call.1} parent=5 // pred_fallthru
        _
      %p455 = scmp.lt.s32.totalorder %s28, 2
      // Predicated region
      $region69: #{tpu_custom_call.1} parent=5 // pred_check
        %p456 = pneg %p455
      $region70: #{tpu_custom_call.1} parent=5 // pred_check_branch
        %458 = sbr.rel (%p456) target = $region72
      $region71: #{tpu_custom_call.1} parent=5 // pred_region
        // Predicated region
        $region73: #{tpu_custom_call.1} parent=71 // pred_check
          %p459 = pneg %p60
        $region74: #{tpu_custom_call.1} parent=71 // pred_check_branch
          %461 = sbr.rel (%p459) target = $region76
        $region75: #{tpu_custom_call.1} parent=71 // pred_region
          %s462 = sand.u32 %s50, 1
          %s463 = scalar_lea.sflag [#allocation5], %s462
          %s464 = sand.u32 %s50, 1
          %s465 = smul.addr %s464, 8
          %s466 = scalar_lea.vmem [#allocation4], %s465
          %s468 = ssub.s32 128, 128
          %469 = vsyncadd %s463, %s468
          %s470 = smul.addr %s35, 128
          %s471 = scalar_lea.hbm %s0, %s470
          %s473 = sshll.u32 %s466, 4
          %s474 = int_to_ptr.vmem [resolvable:$true] %s473
          %476 = dma.hbm_to_vmem [thread:$0]  %s471, 128, %s474, %s463
        $region76: #{tpu_custom_call.1} parent=71 // pred_fallthru
          _
      $region72: #{tpu_custom_call.1} parent=5 // pred_fallthru
        _
      %p477 = scmp.le.s32.totalorder 1, %s28
      %p478 = scmp.lt.s32.totalorder %s28, 3
      %p479 = pnand %p477, %p478
      %p480 = pneg %p479
      // Predicated region
      $region77: #{tpu_custom_call.1} parent=5 // pred_check
        _
      $region78: #{tpu_custom_call.1} parent=5 // pred_check_branch
        %482 = sbr.rel (%p479) target = $region80
      $region79: #{tpu_custom_call.1} parent=5 // pred_region
        %s483 = ssub.s32 %s28, 1
        %s484 = sand.u32 %s53, 1
        %s485 = scalar_lea.sflag [#allocation5], %s484
        %s486 = sand.u32 %s53, 1
        %s487 = smul.addr %s486, 8
        %s488 = scalar_lea.vmem [#allocation4], %s487
        // Predicated region
        $region81: #{tpu_custom_call.1} parent=79 // pred_check
          %p489 = pneg %p66
        $region82: #{tpu_custom_call.1} parent=79 // pred_check_branch
          %491 = sbr.rel (%p489) target = $region84
        $region83: #{tpu_custom_call.1} parent=79 // pred_region
          %492 = dma.done %s485, 128
        $region84: #{tpu_custom_call.1} parent=79 // pred_fallthru
          _
        // Predicated region
        $region85: #{tpu_custom_call.1} parent=79 // pred_check
          %p493 = pneg %p213
        $region86: #{tpu_custom_call.1} parent=79 // pred_check_branch
          %495 = sbr.rel (%p493) target = $region88
        $region87: #{tpu_custom_call.1} parent=79 // pred_region
          %496 = dma.done [#allocation8], 512
        $region88: #{tpu_custom_call.1} parent=79 // pred_fallthru
          _
        %s497 = sand.u32 %s53, 1
        %s498 = scalar_lea.sflag [#allocation5], %s497
        %s499 = sand.u32 %s53, 1
        %s500 = smul.addr %s499, 8
        %s501 = scalar_lea.vmem [#allocation4], %s500
        %p502 = pneg %p66
        %p503 = pneg %p63
        %p504 = pneg %p87
        %p505 = pneg %p84
        %p506 = pneg %p108
        %p507 = pneg %p105
        %p508 = pneg %p129
        %p509 = pneg %p126
        %p510 = pneg %p150
        %p511 = pneg %p147
        %p512 = pneg %p171
        %p513 = pneg %p168
        %p514 = pneg %p192
        %p515 = pneg %p189
        %p516 = pneg %p213
        %p517 = pneg %p210
        %p518 = pneg %p234
        %p519 = pneg %p231
        %p520 = pneg %p255
        %p521 = pneg %p252
        %p522 = pneg %p276
        %p523 = pneg %p273
        %p524 = pneg %p297
        %p525 = pneg %p294
        %p526 = pneg %p318
        %p527 = pneg %p315
        %p528 = pneg %p339
        %p529 = pneg %p336
        %p530 = pneg %p360
        %p531 = pneg %p357
        %p532 = pneg %p388
        %p533 = pneg %p385
        %s534 = sand.u32 %s375, 1
        %s535 = scalar_lea.sflag [#allocation6], %s534
        %s536 = sand.u32 %s375, 1
        %s537 = smul.addr %s536, 8
        %s538 = scalar_lea.vmem [#allocation9], %s537
        %p539 = scmp.eq.s32.totalorder %s38, 0
        // Predicated region
        $region89: #{tpu_custom_call.1} parent=79 // pred_check
          %p540 = pneg %p539
        $region90: #{tpu_custom_call.1} parent=79 // pred_check_branch
          %542 = sbr.rel (%p540) target = $region92
        $region91: #{tpu_custom_call.1} parent=79 // pred_region
          %v543 = vld [vmem:[%s488] sm:$0xff]
          %v544 = vld [vmem:[%s3] sm:$0xff]
          %v545 = vld [vmem:[%s3 + $0x8] sm:$0xff]
          %v546 = vld [vmem:[%s3 + $0x10] sm:$0xff]
          %v547 = vld [vmem:[%s3 + $0x18] sm:$0xff]
          %v548 = vld [vmem:[%s4] sm:$0x1]
          %v550 = vlaneseq
          %v551 = vshrl.u32 %v550, 7
          %v552 = vsub.s32 0, %v551
          %v553 = vrot.slane %v548, %v552
          %vm555 = vcmask 261120
          %v557 = vsel %vm555, %v543, 0
          %559 = vmatprep.subr.mxu0 0.0
          %560 = vmatpush1.msra.mxu0 0.0
          %561 = vmatprep.subr.mxu0 0.0
          %562 = vmatpush1.msra.mxu0 0.0
          %563 = vmatprep.subr.mxu0 0.0
          %564 = vmatpush1.msra.mxu0 0.0
          %565 = vmatprep.subr.mxu0 0.0
          %566 = vmatpush1.msra.mxu0 0.0
          %567 = vmatprep.subr.mxu0 0.0
          %568 = vmatpush1.msra.mxu0 0.0
          %569 = vmatprep.subr.mxu0 0.0
          %570 = vmatpush1.msra.mxu0 0.0
          %571 = vmatprep.subr.mxu0 0.0
          %572 = vmatpush1.msra.mxu0 0.0
          %573 = vmatprep.subr.mxu0 0.0
          %574 = vmatpush1.msra.mxu0 0.0
          %575 = vmatprep.subr.mxu0 0.0
          %576 = vmatpush1.msra.mxu0 0.0
          %577 = vmatprep.subr.mxu0 0.0
          %578 = vmatpush1.msra.mxu0 0.0
          %579 = vmatprep.subr.mxu0 0.0
          %580 = vmatpush1.msra.mxu0 0.0
          %581 = vmatprep.subr.mxu0 0.0
          %582 = vmatpush1.msra.mxu0 0.0
          %583 = vmatprep.subr.mxu0 0.0
          %584 = vmatpush1.msra.mxu0 %v547
          %585 = vmatprep.subr.mxu0 0.0
          %586 = vmatpush1.msra.mxu0 %v546
          %587 = vmatprep.subr.mxu0 0.0
          %588 = vmatpush1.msra.mxu0 %v545
          %589 = vmatprep.subr.mxu0 0.0
          %590 = vmatpush1.msra.mxu0 %v544
          %591 = vmatprep.subr.mxu0 0.0
          %592 = vmatpush2.msra.mxu0 0.0
          %593 = vmatprep.subr.mxu0 0.0
          %594 = vmatpush2.msra.mxu0 0.0
          %595 = vmatprep.subr.mxu0 0.0
          %596 = vmatpush2.msra.mxu0 0.0
          %597 = vmatprep.subr.mxu0 0.0
          %598 = vmatpush2.msra.mxu0 0.0
          %599 = vmatprep.subr.mxu0 0.0
          %600 = vmatpush2.msra.mxu0 0.0
          %601 = vmatprep.subr.mxu0 0.0
          %602 = vmatpush2.msra.mxu0 0.0
          %603 = vmatprep.subr.mxu0 0.0
          %604 = vmatpush2.msra.mxu0 0.0
          %605 = vmatprep.subr.mxu0 0.0
          %606 = vmatpush2.msra.mxu0 0.0
          %607 = vmatprep.subr.mxu0 0.0
          %608 = vmatpush2.msra.mxu0 0.0
          %609 = vmatprep.subr.mxu0 0.0
          %610 = vmatpush2.msra.mxu0 0.0
          %611 = vmatprep.subr.mxu0 0.0
          %612 = vmatpush2.msra.mxu0 0.0
          %613 = vmatprep.subr.mxu0 0.0
          %614 = vmatpush2.msra.mxu0 0.0
          %615 = vmatprep.subr.mxu0 0.0
          %616 = vmatpush2.msra.mxu0 0.0
          %617 = vmatprep.subr.mxu0 0.0
          %618 = vmatpush2.msra.mxu0 0.0
          %619 = vmatprep.subr.mxu0 0.0
          %620 = vmatpush2.msra.mxu0 0.0
          %621 = vmatprep.subr.mxu0 0.0
          %622 = vmatpush2.msra.mxu0 0.0
          %623 = vmatprep.mubr.f32.mxu0 0.0
          %624 = vmatmul.mubr.f32.gmra.mxu0 %v557
          %v625 = vpop.f32.mrf.mxu0
          %v626 = vadd.f32 %v553, %v625
          %v627 = vpop.f32.mrf.mxu0
          %628 = vdwg.mxu0
          %630 = vrot.lane.b32.xlu0 %v626, 120
          %v631 = vpop.permute.xlu0 %630
          %633 = vrot.lane.b32.xlu0 %v626, 112
          %v634 = vpop.permute.xlu0 %633
          %636 = vrot.lane.b32.xlu0 %v626, 104
          %v637 = vpop.permute.xlu0 %636
          %v639 = vcombine.low %v626, %v634
          %v640 = vcombine.high %v626, %v634
          %v642 = vunpack.c.l.s4 1983009808
          %v643 = vunpack.c.0.s8 %v642
          %v644 = vlaneseq
          %v645 = vshrl.u32 %v644, 7
          %v646 = vsub.s32 %v643, %v645
          %v647 = vrot.slane %v639, %v646
          %v649 = vunpack.c.l.s4 1983009808
          %v650 = vunpack.c.0.s8 %v649
          %v651 = vlaneseq
          %v652 = vshrl.u32 %v651, 7
          %v653 = vsub.s32 %v650, %v652
          %v654 = vrot.slane %v640, %v653
          %v655 = vcombine.low %v631, %v637
          %v656 = vcombine.high %v631, %v637
          %v658 = vunpack.c.l.s4 1983009808
          %v659 = vunpack.c.0.s8 %v658
          %v660 = vlaneseq
          %v661 = vshrl.u32 %v660, 7
          %v662 = vsub.s32 %v659, %v661
          %v663 = vrot.slane %v655, %v662
          %v665 = vunpack.c.l.s4 1983009808
          %v666 = vunpack.c.0.s8 %v665
          %v667 = vlaneseq
          %v668 = vshrl.u32 %v667, 7
          %v669 = vsub.s32 %v666, %v668
          %v670 = vrot.slane %v656, %v669
          %v671 = vcombine.low %v647, %v663
          %v672 = vcombine.high %v647, %v663
          %v674 = vunpack.c.l.s4 1934713408
          %v675 = vunpack.c.0.s8 %v674
          %v676 = vlaneseq
          %v677 = vshrl.u32 %v676, 7
          %v678 = vsub.s32 %v675, %v677
          %v679 = vrot.slane %v671, %v678
          %v681 = vunpack.c.l.s4 1934713408
          %v682 = vunpack.c.0.s8 %v681
          %v683 = vlaneseq
          %v684 = vshrl.u32 %v683, 7
          %v685 = vsub.s32 %v682, %v684
          %v686 = vrot.slane %v672, %v685
          %v687 = vcombine.low %v654, %v670
          %v688 = vcombine.high %v654, %v670
          %v690 = vunpack.c.l.s4 1934713408
          %v691 = vunpack.c.0.s8 %v690
          %v692 = vlaneseq
          %v693 = vshrl.u32 %v692, 7
          %v694 = vsub.s32 %v691, %v693
          %v695 = vrot.slane %v687, %v694
          %v697 = vunpack.c.l.s4 1934713408
          %v698 = vunpack.c.0.s8 %v697
          %v699 = vlaneseq
          %v700 = vshrl.u32 %v699, 7
          %v701 = vsub.s32 %v698, %v700
          %v702 = vrot.slane %v688, %v701
          %v703 = vcombine.high %v679, 0.0
          %v704 = vcombine.high %v686, 0.0
          %v705 = vcombine.high %v695, 0.0
          %v706 = vcombine.high %v702, 0.0
          %v707 = vcombine.low %v679, %v686
          %v709 = vunpack.c.l.s4 1983009808
          %v710 = vunpack.c.0.s8 %v709
          %v711 = vlaneseq
          %v712 = vshrl.u32 %v711, 7
          %v713 = vsub.s32 %v710, %v712
          %v714 = vrot.slane %v707, %v713
          %v715 = vcombine.low %v703, %v704
          %v717 = vunpack.c.l.s4 1983009808
          %v718 = vunpack.c.0.s8 %v717
          %v719 = vlaneseq
          %v720 = vshrl.u32 %v719, 7
          %v721 = vsub.s32 %v718, %v720
          %v722 = vrot.slane %v715, %v721
          %v723 = vcombine.low %v695, %v702
          %v725 = vunpack.c.l.s4 1983009808
          %v726 = vunpack.c.0.s8 %v725
          %v727 = vlaneseq
          %v728 = vshrl.u32 %v727, 7
          %v729 = vsub.s32 %v726, %v728
          %v730 = vrot.slane %v723, %v729
          %v731 = vcombine.low %v705, %v706
          %v733 = vunpack.c.l.s4 1983009808
          %v734 = vunpack.c.0.s8 %v733
          %v735 = vlaneseq
          %v736 = vshrl.u32 %v735, 7
          %v737 = vsub.s32 %v734, %v736
          %v738 = vrot.slane %v731, %v737
          %v739 = vcombine.low %v714, %v722
          %v740 = vcombine.high %v714, %v722
          %v742 = vunpack.c.l.s4 1934713408
          %v743 = vunpack.c.0.s8 %v742
          %v744 = vlaneseq
          %v745 = vshrl.u32 %v744, 7
          %v746 = vsub.s32 %v743, %v745
          %v747 = vrot.slane %v739, %v746
          %v749 = vunpack.c.l.s4 1934713408
          %v750 = vunpack.c.0.s8 %v749
          %v751 = vlaneseq
          %v752 = vshrl.u32 %v751, 7
          %v753 = vsub.s32 %v750, %v752
          %v754 = vrot.slane %v740, %v753
          %v755 = vcombine.low %v730, %v738
          %v756 = vcombine.high %v730, %v738
          %v758 = vunpack.c.l.s4 1934713408
          %v759 = vunpack.c.0.s8 %v758
          %v760 = vlaneseq
          %v761 = vshrl.u32 %v760, 7
          %v762 = vsub.s32 %v759, %v761
          %v763 = vrot.slane %v755, %v762
          %v765 = vunpack.c.l.s4 1934713408
          %v766 = vunpack.c.0.s8 %v765
          %v767 = vlaneseq
          %v768 = vshrl.u32 %v767, 7
          %v769 = vsub.s32 %v766, %v768
          %v770 = vrot.slane %v756, %v769
          %v771 = vcombine.low %v747, %v763
          %v772 = vcombine.high %v747, %v763
          %v773 = vcombine.low %v754, %v770
          %v774 = vcombine.high %v754, %v770
          %vm775 = vcmask 64512
          %776 = vst.msk [vmem:[#allocation2] sm:$0xff] %vm775, %v771
          %777 = vst.msk [vmem:[#allocation2 + $0x8] sm:$0xff] %vm775, %v772
          %778 = vst.msk [vmem:[#allocation2 + $0x10] sm:$0xff] %vm775, %v773
          %779 = vst.msk [vmem:[#allocation2 + $0x18] sm:$0xff] %vm775, %v774
          %780 = vrot.lane.b32.xlu0 %v626, 96
          %v781 = vpop.permute.xlu0 %780
          %782 = vrot.lane.b32.xlu0 %v631, 96
          %v783 = vpop.permute.xlu0 %782
          %784 = vrot.lane.b32.xlu0 %v634, 96
          %v785 = vpop.permute.xlu0 %784
          %786 = vrot.lane.b32.xlu0 %v637, 96
          %v787 = vpop.permute.xlu0 %786
          %v792 = vcombine.low %v781, %v785
          %v793 = vcombine.high %v781, %v785
          %v795 = vunpack.c.l.s4 1983009808
          %v796 = vunpack.c.0.s8 %v795
          %v797 = vlaneseq
          %v798 = vshrl.u32 %v797, 7
          %v799 = vsub.s32 %v796, %v798
          %v800 = vrot.slane %v792, %v799
          %v802 = vunpack.c.l.s4 1983009808
          %v803 = vunpack.c.0.s8 %v802
          %v804 = vlaneseq
          %v805 = vshrl.u32 %v804, 7
          %v806 = vsub.s32 %v803, %v805
          %v807 = vrot.slane %v793, %v806
          %v808 = vcombine.low %v783, %v787
          %v809 = vcombine.high %v783, %v787
          %v811 = vunpack.c.l.s4 1983009808
          %v812 = vunpack.c.0.s8 %v811
          %v813 = vlaneseq
          %v814 = vshrl.u32 %v813, 7
          %v815 = vsub.s32 %v812, %v814
          %v816 = vrot.slane %v808, %v815
          %v818 = vunpack.c.l.s4 1983009808
          %v819 = vunpack.c.0.s8 %v818
          %v820 = vlaneseq
          %v821 = vshrl.u32 %v820, 7
          %v822 = vsub.s32 %v819, %v821
          %v823 = vrot.slane %v809, %v822
          %v824 = vcombine.low %v800, %v816
          %v825 = vcombine.high %v800, %v816
          %v827 = vunpack.c.l.s4 1934713408
          %v828 = vunpack.c.0.s8 %v827
          %v829 = vlaneseq
          %v830 = vshrl.u32 %v829, 7
          %v831 = vsub.s32 %v828, %v830
          %v832 = vrot.slane %v824, %v831
          %v834 = vunpack.c.l.s4 1934713408
          %v835 = vunpack.c.0.s8 %v834
          %v836 = vlaneseq
          %v837 = vshrl.u32 %v836, 7
          %v838 = vsub.s32 %v835, %v837
          %v839 = vrot.slane %v825, %v838
          %v840 = vcombine.low %v807, %v823
          %v841 = vcombine.high %v807, %v823
          %v843 = vunpack.c.l.s4 1934713408
          %v844 = vunpack.c.0.s8 %v843
          %v845 = vlaneseq
          %v846 = vshrl.u32 %v845, 7
          %v847 = vsub.s32 %v844, %v846
          %v848 = vrot.slane %v840, %v847
          %v850 = vunpack.c.l.s4 1934713408
          %v851 = vunpack.c.0.s8 %v850
          %v852 = vlaneseq
          %v853 = vshrl.u32 %v852, 7
          %v854 = vsub.s32 %v851, %v853
          %v855 = vrot.slane %v841, %v854
          %v856 = vcombine.high %v832, 0.0
          %v857 = vcombine.high %v839, 0.0
          %v858 = vcombine.high %v848, 0.0
          %v859 = vcombine.high %v855, 0.0
          %v860 = vcombine.low %v832, %v839
          %v862 = vunpack.c.l.s4 1983009808
          %v863 = vunpack.c.0.s8 %v862
          %v864 = vlaneseq
          %v865 = vshrl.u32 %v864, 7
          %v866 = vsub.s32 %v863, %v865
          %v867 = vrot.slane %v860, %v866
          %v868 = vcombine.low %v856, %v857
          %v870 = vunpack.c.l.s4 1983009808
          %v871 = vunpack.c.0.s8 %v870
          %v872 = vlaneseq
          %v873 = vshrl.u32 %v872, 7
          %v874 = vsub.s32 %v871, %v873
          %v875 = vrot.slane %v868, %v874
          %v876 = vcombine.low %v848, %v855
          %v878 = vunpack.c.l.s4 1983009808
          %v879 = vunpack.c.0.s8 %v878
          %v880 = vlaneseq
          %v881 = vshrl.u32 %v880, 7
          %v882 = vsub.s32 %v879, %v881
          %v883 = vrot.slane %v876, %v882
          %v884 = vcombine.low %v858, %v859
          %v886 = vunpack.c.l.s4 1983009808
          %v887 = vunpack.c.0.s8 %v886
          %v888 = vlaneseq
          %v889 = vshrl.u32 %v888, 7
          %v890 = vsub.s32 %v887, %v889
          %v891 = vrot.slane %v884, %v890
          %v892 = vcombine.low %v867, %v875
          %v893 = vcombine.high %v867, %v875
          %v895 = vunpack.c.l.s4 1934713408
          %v896 = vunpack.c.0.s8 %v895
          %v897 = vlaneseq
          %v898 = vshrl.u32 %v897, 7
          %v899 = vsub.s32 %v896, %v898
          %v900 = vrot.slane %v892, %v899
          %v902 = vunpack.c.l.s4 1934713408
          %v903 = vunpack.c.0.s8 %v902
          %v904 = vlaneseq
          %v905 = vshrl.u32 %v904, 7
          %v906 = vsub.s32 %v903, %v905
          %v907 = vrot.slane %v893, %v906
          %v908 = vcombine.low %v883, %v891
          %v909 = vcombine.high %v883, %v891
          %v911 = vunpack.c.l.s4 1934713408
          %v912 = vunpack.c.0.s8 %v911
          %v913 = vlaneseq
          %v914 = vshrl.u32 %v913, 7
          %v915 = vsub.s32 %v912, %v914
          %v916 = vrot.slane %v908, %v915
          %v918 = vunpack.c.l.s4 1934713408
          %v919 = vunpack.c.0.s8 %v918
          %v920 = vlaneseq
          %v921 = vshrl.u32 %v920, 7
          %v922 = vsub.s32 %v919, %v921
          %v923 = vrot.slane %v909, %v922
          %v924 = vcombine.low %v900, %v916
          %v925 = vcombine.high %v900, %v916
          %v926 = vcombine.low %v907, %v923
          %v927 = vcombine.high %v907, %v923
          %928 = vst.msk [vmem:[#allocation3] sm:$0xff] %vm775, %v924
          %929 = vst.msk [vmem:[#allocation3 + $0x8] sm:$0xff] %vm775, %v925
          %930 = vst.msk [vmem:[#allocation3 + $0x10] sm:$0xff] %vm775, %v926
          %931 = vst.msk [vmem:[#allocation3 + $0x18] sm:$0xff] %vm775, %v927
        $region92: #{tpu_custom_call.1} parent=79 // pred_fallthru
          _
        %s932 = smul.u32 %s38, 8
        %s933 = scalar_lea.vmem %s488, %s932 [#allocation4]
        %v934 = vld [vmem:[%s933] sm:$0xff]
        %v935 = vld [vmem:[%s1] sm:$0xff]
        %v936 = vld [vmem:[%s1 + $0x8] sm:$0xff]
        %v937 = vld [vmem:[%s1 + $0x10] sm:$0xff]
        %v938 = vld [vmem:[%s1 + $0x18] sm:$0xff]
        %v939 = vld [vmem:[%s2] sm:$0x1]
        %v941 = vlaneseq
        %v942 = vshrl.u32 %v941, 7
        %v943 = vsub.s32 0, %v942
        %v944 = vrot.slane %v939, %v943
        %vm946 = vcmask 261120
        %v948 = vsel %vm946, %v934, 0
        %950 = vmatprep.subr.mxu0 0.0
        %951 = vmatpush1.msra.mxu0 0.0
        %952 = vmatprep.subr.mxu0 0.0
        %953 = vmatpush1.msra.mxu0 0.0
        %954 = vmatprep.subr.mxu0 0.0
        %955 = vmatpush1.msra.mxu0 0.0
        %956 = vmatprep.subr.mxu0 0.0
        %957 = vmatpush1.msra.mxu0 0.0
        %958 = vmatprep.subr.mxu0 0.0
        %959 = vmatpush1.msra.mxu0 0.0
        %960 = vmatprep.subr.mxu0 0.0
        %961 = vmatpush1.msra.mxu0 0.0
        %962 = vmatprep.subr.mxu0 0.0
        %963 = vmatpush1.msra.mxu0 0.0
        %964 = vmatprep.subr.mxu0 0.0
        %965 = vmatpush1.msra.mxu0 0.0
        %966 = vmatprep.subr.mxu0 0.0
        %967 = vmatpush1.msra.mxu0 0.0
        %968 = vmatprep.subr.mxu0 0.0
        %969 = vmatpush1.msra.mxu0 0.0
        %970 = vmatprep.subr.mxu0 0.0
        %971 = vmatpush1.msra.mxu0 0.0
        %972 = vmatprep.subr.mxu0 0.0
        %973 = vmatpush1.msra.mxu0 0.0
        %974 = vmatprep.subr.mxu0 0.0
        %975 = vmatpush1.msra.mxu0 %v938
        %976 = vmatprep.subr.mxu0 0.0
        %977 = vmatpush1.msra.mxu0 %v937
        %978 = vmatprep.subr.mxu0 0.0
        %979 = vmatpush1.msra.mxu0 %v936
        %980 = vmatprep.subr.mxu0 0.0
        %981 = vmatpush1.msra.mxu0 %v935
        %982 = vmatprep.subr.mxu0 0.0
        %983 = vmatpush2.msra.mxu0 0.0
        %984 = vmatprep.subr.mxu0 0.0
        %985 = vmatpush2.msra.mxu0 0.0
        %986 = vmatprep.subr.mxu0 0.0
        %987 = vmatpush2.msra.mxu0 0.0
        %988 = vmatprep.subr.mxu0 0.0
        %989 = vmatpush2.msra.mxu0 0.0
        %990 = vmatprep.subr.mxu0 0.0
        %991 = vmatpush2.msra.mxu0 0.0
        %992 = vmatprep.subr.mxu0 0.0
        %993 = vmatpush2.msra.mxu0 0.0
        %994 = vmatprep.subr.mxu0 0.0
        %995 = vmatpush2.msra.mxu0 0.0
        %996 = vmatprep.subr.mxu0 0.0
        %997 = vmatpush2.msra.mxu0 0.0
        %998 = vmatprep.subr.mxu0 0.0
        %999 = vmatpush2.msra.mxu0 0.0
        %1000 = vmatprep.subr.mxu0 0.0
        %1001 = vmatpush2.msra.mxu0 0.0
        %1002 = vmatprep.subr.mxu0 0.0
        %1003 = vmatpush2.msra.mxu0 0.0
        %1004 = vmatprep.subr.mxu0 0.0
        %1005 = vmatpush2.msra.mxu0 0.0
        %1006 = vmatprep.subr.mxu0 0.0
        %1007 = vmatpush2.msra.mxu0 0.0
        %1008 = vmatprep.subr.mxu0 0.0
        %1009 = vmatpush2.msra.mxu0 0.0
        %1010 = vmatprep.subr.mxu0 0.0
        %1011 = vmatpush2.msra.mxu0 0.0
        %1012 = vmatprep.subr.mxu0 0.0
        %1013 = vmatpush2.msra.mxu0 0.0
        %1014 = vmatprep.mubr.f32.mxu0 0.0
        %1015 = vmatmul.mubr.f32.gmra.mxu0 %v948
        %v1016 = vpop.f32.mrf.mxu0
        %v1017 = vadd.f32 %v944, %v1016
        %v1018 = vpop.f32.mrf.mxu0
        %1019 = vdwg.mxu0
        %1021 = vrot.lane.b32.xlu0 %v1017, 120
        %v1022 = vpop.permute.xlu0 %1021
        %1024 = vrot.lane.b32.xlu0 %v1017, 112
        %v1025 = vpop.permute.xlu0 %1024
        %1027 = vrot.lane.b32.xlu0 %v1017, 104
        %v1028 = vpop.permute.xlu0 %1027
        %v1030 = vcombine.low %v1017, %v1025
        %v1031 = vcombine.high %v1017, %v1025
        %v1033 = vunpack.c.l.s4 1983009808
        %v1034 = vunpack.c.0.s8 %v1033
        %v1035 = vlaneseq
        %v1036 = vshrl.u32 %v1035, 7
        %v1037 = vsub.s32 %v1034, %v1036
        %v1038 = vrot.slane %v1030, %v1037
        %v1040 = vunpack.c.l.s4 1983009808
        %v1041 = vunpack.c.0.s8 %v1040
        %v1042 = vlaneseq
        %v1043 = vshrl.u32 %v1042, 7
        %v1044 = vsub.s32 %v1041, %v1043
        %v1045 = vrot.slane %v1031, %v1044
        %v1046 = vcombine.low %v1022, %v1028
        %v1047 = vcombine.high %v1022, %v1028
        %v1049 = vunpack.c.l.s4 1983009808
        %v1050 = vunpack.c.0.s8 %v1049
        %v1051 = vlaneseq
        %v1052 = vshrl.u32 %v1051, 7
        %v1053 = vsub.s32 %v1050, %v1052
        %v1054 = vrot.slane %v1046, %v1053
        %v1056 = vunpack.c.l.s4 1983009808
        %v1057 = vunpack.c.0.s8 %v1056
        %v1058 = vlaneseq
        %v1059 = vshrl.u32 %v1058, 7
        %v1060 = vsub.s32 %v1057, %v1059
        %v1061 = vrot.slane %v1047, %v1060
        %v1062 = vcombine.low %v1038, %v1054
        %v1063 = vcombine.high %v1038, %v1054
        %v1065 = vunpack.c.l.s4 1934713408
        %v1066 = vunpack.c.0.s8 %v1065
        %v1067 = vlaneseq
        %v1068 = vshrl.u32 %v1067, 7
        %v1069 = vsub.s32 %v1066, %v1068
        %v1070 = vrot.slane %v1062, %v1069
        %v1072 = vunpack.c.l.s4 1934713408
        %v1073 = vunpack.c.0.s8 %v1072
        %v1074 = vlaneseq
        %v1075 = vshrl.u32 %v1074, 7
        %v1076 = vsub.s32 %v1073, %v1075
        %v1077 = vrot.slane %v1063, %v1076
        %v1078 = vcombine.low %v1045, %v1061
        %v1079 = vcombine.high %v1045, %v1061
        %v1081 = vunpack.c.l.s4 1934713408
        %v1082 = vunpack.c.0.s8 %v1081
        %v1083 = vlaneseq
        %v1084 = vshrl.u32 %v1083, 7
        %v1085 = vsub.s32 %v1082, %v1084
        %v1086 = vrot.slane %v1078, %v1085
        %v1088 = vunpack.c.l.s4 1934713408
        %v1089 = vunpack.c.0.s8 %v1088
        %v1090 = vlaneseq
        %v1091 = vshrl.u32 %v1090, 7
        %v1092 = vsub.s32 %v1089, %v1091
        %v1093 = vrot.slane %v1079, %v1092
        %v1094 = vcombine.high %v1070, 0.0
        %v1095 = vcombine.high %v1077, 0.0
        %v1096 = vcombine.high %v1086, 0.0
        %v1097 = vcombine.high %v1093, 0.0
        %v1098 = vcombine.low %v1070, %v1077
        %v1100 = vunpack.c.l.s4 1983009808
        %v1101 = vunpack.c.0.s8 %v1100
        %v1102 = vlaneseq
        %v1103 = vshrl.u32 %v1102, 7
        %v1104 = vsub.s32 %v1101, %v1103
        %v1105 = vrot.slane %v1098, %v1104
        %v1106 = vcombine.low %v1094, %v1095
        %v1108 = vunpack.c.l.s4 1983009808
        %v1109 = vunpack.c.0.s8 %v1108
        %v1110 = vlaneseq
        %v1111 = vshrl.u32 %v1110, 7
        %v1112 = vsub.s32 %v1109, %v1111
        %v1113 = vrot.slane %v1106, %v1112
        %v1114 = vcombine.low %v1086, %v1093
        %v1116 = vunpack.c.l.s4 1983009808
        %v1117 = vunpack.c.0.s8 %v1116
        %v1118 = vlaneseq
        %v1119 = vshrl.u32 %v1118, 7
        %v1120 = vsub.s32 %v1117, %v1119
        %v1121 = vrot.slane %v1114, %v1120
        %v1122 = vcombine.low %v1096, %v1097
        %v1124 = vunpack.c.l.s4 1983009808
        %v1125 = vunpack.c.0.s8 %v1124
        %v1126 = vlaneseq
        %v1127 = vshrl.u32 %v1126, 7
        %v1128 = vsub.s32 %v1125, %v1127
        %v1129 = vrot.slane %v1122, %v1128
        %v1130 = vcombine.low %v1105, %v1113
        %v1131 = vcombine.high %v1105, %v1113
        %v1133 = vunpack.c.l.s4 1934713408
        %v1134 = vunpack.c.0.s8 %v1133
        %v1135 = vlaneseq
        %v1136 = vshrl.u32 %v1135, 7
        %v1137 = vsub.s32 %v1134, %v1136
        %v1138 = vrot.slane %v1130, %v1137
        %v1140 = vunpack.c.l.s4 1934713408
        %v1141 = vunpack.c.0.s8 %v1140
        %v1142 = vlaneseq
        %v1143 = vshrl.u32 %v1142, 7
        %v1144 = vsub.s32 %v1141, %v1143
        %v1145 = vrot.slane %v1131, %v1144
        %v1146 = vcombine.low %v1121, %v1129
        %v1147 = vcombine.high %v1121, %v1129
        %v1149 = vunpack.c.l.s4 1934713408
        %v1150 = vunpack.c.0.s8 %v1149
        %v1151 = vlaneseq
        %v1152 = vshrl.u32 %v1151, 7
        %v1153 = vsub.s32 %v1150, %v1152
        %v1154 = vrot.slane %v1146, %v1153
        %v1156 = vunpack.c.l.s4 1934713408
        %v1157 = vunpack.c.0.s8 %v1156
        %v1158 = vlaneseq
        %v1159 = vshrl.u32 %v1158, 7
        %v1160 = vsub.s32 %v1157, %v1159
        %v1161 = vrot.slane %v1147, %v1160
        %v1162 = vcombine.low %v1138, %v1154
        %v1163 = vcombine.high %v1138, %v1154
        %v1164 = vcombine.low %v1145, %v1161
        %v1165 = vcombine.high %v1145, %v1161
        %v1166 = vld [vmem:[#allocation2] sm:$0xff]
        %v1167 = vld [vmem:[#allocation2 + $0x8] sm:$0xff]
        %v1168 = vld [vmem:[#allocation2 + $0x10] sm:$0xff]
        %v1169 = vld [vmem:[#allocation2 + $0x18] sm:$0xff]
        %vm1170 = vcmask 64512
        %v1172 = vsel %vm1170, %v1162, 0
        %v1175 = vsel %vm1170, %v1166, 0
        %1177 = vmatprep.subr.mxu0 0.0
        %1178 = vmatpush1.xpose.msra.mxu0 0.0
        %1179 = vmatprep.subr.mxu0 0.0
        %1180 = vmatpush1.xpose.msra.mxu0 0.0
        %1181 = vmatprep.subr.mxu0 0.0
        %1182 = vmatpush1.xpose.msra.mxu0 0.0
        %1183 = vmatprep.subr.mxu0 0.0
        %1184 = vmatpush1.xpose.msra.mxu0 0.0
        %1185 = vmatprep.subr.mxu0 0.0
        %1186 = vmatpush1.xpose.msra.mxu0 0.0
        %1187 = vmatprep.subr.mxu0 0.0
        %1188 = vmatpush1.xpose.msra.mxu0 0.0
        %1189 = vmatprep.subr.mxu0 0.0
        %1190 = vmatpush1.xpose.msra.mxu0 0.0
        %1191 = vmatprep.subr.mxu0 0.0
        %1192 = vmatpush1.xpose.msra.mxu0 0.0
        %1193 = vmatprep.subr.mxu0 0.0
        %1194 = vmatpush1.xpose.msra.mxu0 0.0
        %1195 = vmatprep.subr.mxu0 0.0
        %1196 = vmatpush1.xpose.msra.mxu0 0.0
        %1197 = vmatprep.subr.mxu0 0.0
        %1198 = vmatpush1.xpose.msra.mxu0 0.0
        %1199 = vmatprep.subr.mxu0 0.0
        %1200 = vmatpush1.xpose.msra.mxu0 0.0
        %1201 = vmatprep.subr.mxu0 0.0
        %1202 = vmatpush1.xpose.msra.mxu0 0.0
        %1203 = vmatprep.subr.mxu0 0.0
        %1204 = vmatpush1.xpose.msra.mxu0 0.0
        %1205 = vmatprep.subr.mxu0 0.0
        %1206 = vmatpush1.xpose.msra.mxu0 0.0
        %1207 = vmatprep.subr.mxu0 0.0
        %1208 = vmatpush1.xpose.msra.mxu0 %v1175
        %1209 = vmatprep.subr.mxu0 0.0
        %1210 = vmatpush2.xpose.msra.mxu0 0.0
        %1211 = vmatprep.subr.mxu0 0.0
        %1212 = vmatpush2.xpose.msra.mxu0 0.0
        %1213 = vmatprep.subr.mxu0 0.0
        %1214 = vmatpush2.xpose.msra.mxu0 0.0
        %1215 = vmatprep.subr.mxu0 0.0
        %1216 = vmatpush2.xpose.msra.mxu0 0.0
        %1217 = vmatprep.subr.mxu0 0.0
        %1218 = vmatpush2.xpose.msra.mxu0 0.0
        %1219 = vmatprep.subr.mxu0 0.0
        %1220 = vmatpush2.xpose.msra.mxu0 0.0
        %1221 = vmatprep.subr.mxu0 0.0
        %1222 = vmatpush2.xpose.msra.mxu0 0.0
        %1223 = vmatprep.subr.mxu0 0.0
        %1224 = vmatpush2.xpose.msra.mxu0 0.0
        %1225 = vmatprep.subr.mxu0 0.0
        %1226 = vmatpush2.xpose.msra.mxu0 0.0
        %1227 = vmatprep.subr.mxu0 0.0
        %1228 = vmatpush2.xpose.msra.mxu0 0.0
        %1229 = vmatprep.subr.mxu0 0.0
        %1230 = vmatpush2.xpose.msra.mxu0 0.0
        %1231 = vmatprep.subr.mxu0 0.0
        %1232 = vmatpush2.xpose.msra.mxu0 0.0
        %1233 = vmatprep.subr.mxu0 0.0
        %1234 = vmatpush2.xpose.msra.mxu0 0.0
        %1235 = vmatprep.subr.mxu0 0.0
        %1236 = vmatpush2.xpose.msra.mxu0 0.0
        %1237 = vmatprep.subr.mxu0 0.0
        %1238 = vmatpush2.xpose.msra.mxu0 0.0
        %1239 = vmatprep.subr.mxu0 0.0
        %1240 = vmatpush2.xpose.msra.mxu0 0.0
        %1241 = vmatprep.mubr.f32.mxu0 0.0
        %1242 = vmatmul.mubr.f32.gmra.mxu0 %v1172
        %v1243 = vpop.f32.mrf.mxu0
        %v1244 = vadd.f32 0.0, %v1243
        %v1245 = vpop.f32.mrf.mxu0
        %1246 = vdwg.mxu0
        %v1248 = vsel %vm1170, %v1163, 0
        %v1251 = vsel %vm1170, %v1167, 0
        %1253 = vmatprep.subr.mxu0 0.0
        %1254 = vmatpush1.xpose.msra.mxu0 0.0
        %1255 = vmatprep.subr.mxu0 0.0
        %1256 = vmatpush1.xpose.msra.mxu0 0.0
        %1257 = vmatprep.subr.mxu0 0.0
        %1258 = vmatpush1.xpose.msra.mxu0 0.0
        %1259 = vmatprep.subr.mxu0 0.0
        %1260 = vmatpush1.xpose.msra.mxu0 0.0
        %1261 = vmatprep.subr.mxu0 0.0
        %1262 = vmatpush1.xpose.msra.mxu0 0.0
        %1263 = vmatprep.subr.mxu0 0.0
        %1264 = vmatpush1.xpose.msra.mxu0 0.0
        %1265 = vmatprep.subr.mxu0 0.0
        %1266 = vmatpush1.xpose.msra.mxu0 0.0
        %1267 = vmatprep.subr.mxu0 0.0
        %1268 = vmatpush1.xpose.msra.mxu0 0.0
        %1269 = vmatprep.subr.mxu0 0.0
        %1270 = vmatpush1.xpose.msra.mxu0 0.0
        %1271 = vmatprep.subr.mxu0 0.0
        %1272 = vmatpush1.xpose.msra.mxu0 0.0
        %1273 = vmatprep.subr.mxu0 0.0
        %1274 = vmatpush1.xpose.msra.mxu0 0.0
        %1275 = vmatprep.subr.mxu0 0.0
        %1276 = vmatpush1.xpose.msra.mxu0 0.0
        %1277 = vmatprep.subr.mxu0 0.0
        %1278 = vmatpush1.xpose.msra.mxu0 0.0
        %1279 = vmatprep.subr.mxu0 0.0
        %1280 = vmatpush1.xpose.msra.mxu0 0.0
        %1281 = vmatprep.subr.mxu0 0.0
        %1282 = vmatpush1.xpose.msra.mxu0 0.0
        %1283 = vmatprep.subr.mxu0 0.0
        %1284 = vmatpush1.xpose.msra.mxu0 %v1251
        %1285 = vmatprep.subr.mxu0 0.0
        %1286 = vmatpush2.xpose.msra.mxu0 0.0
        %1287 = vmatprep.subr.mxu0 0.0
        %1288 = vmatpush2.xpose.msra.mxu0 0.0
        %1289 = vmatprep.subr.mxu0 0.0
        %1290 = vmatpush2.xpose.msra.mxu0 0.0
        %1291 = vmatprep.subr.mxu0 0.0
        %1292 = vmatpush2.xpose.msra.mxu0 0.0
        %1293 = vmatprep.subr.mxu0 0.0
        %1294 = vmatpush2.xpose.msra.mxu0 0.0
        %1295 = vmatprep.subr.mxu0 0.0
        %1296 = vmatpush2.xpose.msra.mxu0 0.0
        %1297 = vmatprep.subr.mxu0 0.0
        %1298 = vmatpush2.xpose.msra.mxu0 0.0
        %1299 = vmatprep.subr.mxu0 0.0
        %1300 = vmatpush2.xpose.msra.mxu0 0.0
        %1301 = vmatprep.subr.mxu0 0.0
        %1302 = vmatpush2.xpose.msra.mxu0 0.0
        %1303 = vmatprep.subr.mxu0 0.0
        %1304 = vmatpush2.xpose.msra.mxu0 0.0
        %1305 = vmatprep.subr.mxu0 0.0
        %1306 = vmatpush2.xpose.msra.mxu0 0.0
        %1307 = vmatprep.subr.mxu0 0.0
        %1308 = vmatpush2.xpose.msra.mxu0 0.0
        %1309 = vmatprep.subr.mxu0 0.0
        %1310 = vmatpush2.xpose.msra.mxu0 0.0
        %1311 = vmatprep.subr.mxu0 0.0
        %1312 = vmatpush2.xpose.msra.mxu0 0.0
        %1313 = vmatprep.subr.mxu0 0.0
        %1314 = vmatpush2.xpose.msra.mxu0 0.0
        %1315 = vmatprep.subr.mxu0 0.0
        %1316 = vmatpush2.xpose.msra.mxu0 0.0
        %1317 = vmatprep.mubr.f32.mxu0 0.0
        %1318 = vmatmul.mubr.f32.gmra.mxu0 %v1248
        %v1319 = vpop.f32.mrf.mxu0
        %v1320 = vadd.f32 0.0, %v1319
        %v1321 = vpop.f32.mrf.mxu0
        %1322 = vdwg.mxu0
        %v1324 = vsel %vm1170, %v1164, 0
        %v1327 = vsel %vm1170, %v1168, 0
        %1329 = vmatprep.subr.mxu0 0.0
        %1330 = vmatpush1.xpose.msra.mxu0 0.0
        %1331 = vmatprep.subr.mxu0 0.0
        %1332 = vmatpush1.xpose.msra.mxu0 0.0
        %1333 = vmatprep.subr.mxu0 0.0
        %1334 = vmatpush1.xpose.msra.mxu0 0.0
        %1335 = vmatprep.subr.mxu0 0.0
        %1336 = vmatpush1.xpose.msra.mxu0 0.0
        %1337 = vmatprep.subr.mxu0 0.0
        %1338 = vmatpush1.xpose.msra.mxu0 0.0
        %1339 = vmatprep.subr.mxu0 0.0
        %1340 = vmatpush1.xpose.msra.mxu0 0.0
        %1341 = vmatprep.subr.mxu0 0.0
        %1342 = vmatpush1.xpose.msra.mxu0 0.0
        %1343 = vmatprep.subr.mxu0 0.0
        %1344 = vmatpush1.xpose.msra.mxu0 0.0
        %1345 = vmatprep.subr.mxu0 0.0
        %1346 = vmatpush1.xpose.msra.mxu0 0.0
        %1347 = vmatprep.subr.mxu0 0.0
        %1348 = vmatpush1.xpose.msra.mxu0 0.0
        %1349 = vmatprep.subr.mxu0 0.0
        %1350 = vmatpush1.xpose.msra.mxu0 0.0
        %1351 = vmatprep.subr.mxu0 0.0
        %1352 = vmatpush1.xpose.msra.mxu0 0.0
        %1353 = vmatprep.subr.mxu0 0.0
        %1354 = vmatpush1.xpose.msra.mxu0 0.0
        %1355 = vmatprep.subr.mxu0 0.0
        %1356 = vmatpush1.xpose.msra.mxu0 0.0
        %1357 = vmatprep.subr.mxu0 0.0
        %1358 = vmatpush1.xpose.msra.mxu0 0.0
        %1359 = vmatprep.subr.mxu0 0.0
        %1360 = vmatpush1.xpose.msra.mxu0 %v1327
        %1361 = vmatprep.subr.mxu0 0.0
        %1362 = vmatpush2.xpose.msra.mxu0 0.0
        %1363 = vmatprep.subr.mxu0 0.0
        %1364 = vmatpush2.xpose.msra.mxu0 0.0
        %1365 = vmatprep.subr.mxu0 0.0
        %1366 = vmatpush2.xpose.msra.mxu0 0.0
        %1367 = vmatprep.subr.mxu0 0.0
        %1368 = vmatpush2.xpose.msra.mxu0 0.0
        %1369 = vmatprep.subr.mxu0 0.0
        %1370 = vmatpush2.xpose.msra.mxu0 0.0
        %1371 = vmatprep.subr.mxu0 0.0
        %1372 = vmatpush2.xpose.msra.mxu0 0.0
        %1373 = vmatprep.subr.mxu0 0.0
        %1374 = vmatpush2.xpose.msra.mxu0 0.0
        %1375 = vmatprep.subr.mxu0 0.0
        %1376 = vmatpush2.xpose.msra.mxu0 0.0
        %1377 = vmatprep.subr.mxu0 0.0
        %1378 = vmatpush2.xpose.msra.mxu0 0.0
        %1379 = vmatprep.subr.mxu0 0.0
        %1380 = vmatpush2.xpose.msra.mxu0 0.0
        %1381 = vmatprep.subr.mxu0 0.0
        %1382 = vmatpush2.xpose.msra.mxu0 0.0
        %1383 = vmatprep.subr.mxu0 0.0
        %1384 = vmatpush2.xpose.msra.mxu0 0.0
        %1385 = vmatprep.subr.mxu0 0.0
        %1386 = vmatpush2.xpose.msra.mxu0 0.0
        %1387 = vmatprep.subr.mxu0 0.0
        %1388 = vmatpush2.xpose.msra.mxu0 0.0
        %1389 = vmatprep.subr.mxu0 0.0
        %1390 = vmatpush2.xpose.msra.mxu0 0.0
        %1391 = vmatprep.subr.mxu0 0.0
        %1392 = vmatpush2.xpose.msra.mxu0 0.0
        %1393 = vmatprep.mubr.f32.mxu0 0.0
        %1394 = vmatmul.mubr.f32.gmra.mxu0 %v1324
        %v1395 = vpop.f32.mrf.mxu0
        %v1396 = vadd.f32 0.0, %v1395
        %v1397 = vpop.f32.mrf.mxu0
        %1398 = vdwg.mxu0
        %v1400 = vsel %vm1170, %v1165, 0
        %v1403 = vsel %vm1170, %v1169, 0
        %1405 = vmatprep.subr.mxu0 0.0
        %1406 = vmatpush1.xpose.msra.mxu0 0.0
        %1407 = vmatprep.subr.mxu0 0.0
        %1408 = vmatpush1.xpose.msra.mxu0 0.0
        %1409 = vmatprep.subr.mxu0 0.0
        %1410 = vmatpush1.xpose.msra.mxu0 0.0
        %1411 = vmatprep.subr.mxu0 0.0
        %1412 = vmatpush1.xpose.msra.mxu0 0.0
        %1413 = vmatprep.subr.mxu0 0.0
        %1414 = vmatpush1.xpose.msra.mxu0 0.0
        %1415 = vmatprep.subr.mxu0 0.0
        %1416 = vmatpush1.xpose.msra.mxu0 0.0
        %1417 = vmatprep.subr.mxu0 0.0
        %1418 = vmatpush1.xpose.msra.mxu0 0.0
        %1419 = vmatprep.subr.mxu0 0.0
        %1420 = vmatpush1.xpose.msra.mxu0 0.0
        %1421 = vmatprep.subr.mxu0 0.0
        %1422 = vmatpush1.xpose.msra.mxu0 0.0
        %1423 = vmatprep.subr.mxu0 0.0
        %1424 = vmatpush1.xpose.msra.mxu0 0.0
        %1425 = vmatprep.subr.mxu0 0.0
        %1426 = vmatpush1.xpose.msra.mxu0 0.0
        %1427 = vmatprep.subr.mxu0 0.0
        %1428 = vmatpush1.xpose.msra.mxu0 0.0
        %1429 = vmatprep.subr.mxu0 0.0
        %1430 = vmatpush1.xpose.msra.mxu0 0.0
        %1431 = vmatprep.subr.mxu0 0.0
        %1432 = vmatpush1.xpose.msra.mxu0 0.0
        %1433 = vmatprep.subr.mxu0 0.0
        %1434 = vmatpush1.xpose.msra.mxu0 0.0
        %1435 = vmatprep.subr.mxu0 0.0
        %1436 = vmatpush1.xpose.msra.mxu0 %v1403
        %1437 = vmatprep.subr.mxu0 0.0
        %1438 = vmatpush2.xpose.msra.mxu0 0.0
        %1439 = vmatprep.subr.mxu0 0.0
        %1440 = vmatpush2.xpose.msra.mxu0 0.0
        %1441 = vmatprep.subr.mxu0 0.0
        %1442 = vmatpush2.xpose.msra.mxu0 0.0
        %1443 = vmatprep.subr.mxu0 0.0
        %1444 = vmatpush2.xpose.msra.mxu0 0.0
        %1445 = vmatprep.subr.mxu0 0.0
        %1446 = vmatpush2.xpose.msra.mxu0 0.0
        %1447 = vmatprep.subr.mxu0 0.0
        %1448 = vmatpush2.xpose.msra.mxu0 0.0
        %1449 = vmatprep.subr.mxu0 0.0
        %1450 = vmatpush2.xpose.msra.mxu0 0.0
        %1451 = vmatprep.subr.mxu0 0.0
        %1452 = vmatpush2.xpose.msra.mxu0 0.0
        %1453 = vmatprep.subr.mxu0 0.0
        %1454 = vmatpush2.xpose.msra.mxu0 0.0
        %1455 = vmatprep.subr.mxu0 0.0
        %1456 = vmatpush2.xpose.msra.mxu0 0.0
        %1457 = vmatprep.subr.mxu0 0.0
        %1458 = vmatpush2.xpose.msra.mxu0 0.0
        %1459 = vmatprep.subr.mxu0 0.0
        %1460 = vmatpush2.xpose.msra.mxu0 0.0
        %1461 = vmatprep.subr.mxu0 0.0
        %1462 = vmatpush2.xpose.msra.mxu0 0.0
        %1463 = vmatprep.subr.mxu0 0.0
        %1464 = vmatpush2.xpose.msra.mxu0 0.0
        %1465 = vmatprep.subr.mxu0 0.0
        %1466 = vmatpush2.xpose.msra.mxu0 0.0
        %1467 = vmatprep.subr.mxu0 0.0
        %1468 = vmatpush2.xpose.msra.mxu0 0.0
        %1469 = vmatprep.mubr.f32.mxu0 0.0
        %1470 = vmatmul.mubr.f32.gmra.mxu0 %v1400
        %v1471 = vpop.f32.mrf.mxu0
        %v1472 = vadd.f32 0.0, %v1471
        %v1473 = vpop.f32.mrf.mxu0
        %1474 = vdwg.mxu0
        %v1475 = vsel %vm1170, %v1244, -inf
        %1476 = vmax.xlane.f32.xlu0 %v1475
        %v1477 = vpop.xlane.xlu0 %1476
        %v1478 = vsel %vm1170, %v1320, -inf
        %1479 = vmax.xlane.f32.xlu0 %v1478
        %v1480 = vpop.xlane.xlu0 %1479
        %v1481 = vsel %vm1170, %v1396, -inf
        %1482 = vmax.xlane.f32.xlu0 %v1481
        %v1483 = vpop.xlane.xlu0 %1482
        %v1484 = vsel %vm1170, %v1472, -inf
        %1485 = vmax.xlane.f32.xlu0 %v1484
        %v1486 = vpop.xlane.xlu0 %1485
        %v1487 = vsub.f32 %v1244, %v1477
        %v1488 = vsub.f32 %v1320, %v1480
        %v1489 = vsub.f32 %v1396, %v1483
        %v1490 = vsub.f32 %v1472, %v1486
        %v1491 = vmul.f32 %v1487, 1.442695
        %v1492 = vpow.pop %v1491
        %v1493 = vmul.f32 %v1488, 1.442695
        %v1494 = vpow.pop %v1493
        %v1495 = vmul.f32 %v1489, 1.442695
        %v1496 = vpow.pop %v1495
        %v1497 = vmul.f32 %v1490, 1.442695
        %v1498 = vpow.pop %v1497
        %v1499 = vsel %vm1170, %v1492, 0.0
        %1500 = vadd.xlane.f32.xlu0 %v1499
        %v1501 = vpop.xlane.xlu0 %1500
        %v1502 = vsel %vm1170, %v1494, 0.0
        %1503 = vadd.xlane.f32.xlu0 %v1502
        %v1504 = vpop.xlane.xlu0 %1503
        %v1505 = vsel %vm1170, %v1496, 0.0
        %1506 = vadd.xlane.f32.xlu0 %v1505
        %v1507 = vpop.xlane.xlu0 %1506
        %v1508 = vsel %vm1170, %v1498, 0.0
        %1509 = vadd.xlane.f32.xlu0 %v1508
        %v1510 = vpop.xlane.xlu0 %1509
        %v1511 = vrcp.pop %v1501
        %v1512 = vrcp.pop %v1504
        %v1513 = vrcp.pop %v1507
        %v1514 = vrcp.pop %v1510
        %v1515 = vmul.f32 %v1492, %v1511
        %v1516 = vmul.f32 %v1494, %v1512
        %v1517 = vmul.f32 %v1496, %v1513
        %v1518 = vmul.f32 %v1498, %v1514
        %v1519 = vld [vmem:[#allocation3] sm:$0xff]
        %v1520 = vld [vmem:[#allocation3 + $0x8] sm:$0xff]
        %v1521 = vld [vmem:[#allocation3 + $0x10] sm:$0xff]
        %v1522 = vld [vmem:[#allocation3 + $0x18] sm:$0xff]
        %v1524 = vsel %vm1170, %v1515, 0
        %1526 = vmatprep.subr.mxu0 0.0
        %1527 = vmatpush1.msra.mxu0 0.0
        %1528 = vmatprep.subr.mxu0 0.0
        %1529 = vmatpush1.msra.mxu0 0.0
        %1530 = vmatprep.subr.mxu0 0.0
        %1531 = vmatpush1.msra.mxu0 0.0
        %1532 = vmatprep.subr.mxu0 0.0
        %1533 = vmatpush1.msra.mxu0 0.0
        %1534 = vmatprep.subr.mxu0 0.0
        %1535 = vmatpush1.msra.mxu0 0.0
        %1536 = vmatprep.subr.mxu0 0.0
        %1537 = vmatpush1.msra.mxu0 0.0
        %1538 = vmatprep.subr.mxu0 0.0
        %1539 = vmatpush1.msra.mxu0 0.0
        %1540 = vmatprep.subr.mxu0 0.0
        %1541 = vmatpush1.msra.mxu0 0.0
        %1542 = vmatprep.subr.mxu0 0.0
        %1543 = vmatpush1.msra.mxu0 0.0
        %1544 = vmatprep.subr.mxu0 0.0
        %1545 = vmatpush1.msra.mxu0 0.0
        %1546 = vmatprep.subr.mxu0 0.0
        %1547 = vmatpush1.msra.mxu0 0.0
        %1548 = vmatprep.subr.mxu0 0.0
        %1549 = vmatpush1.msra.mxu0 0.0
        %1550 = vmatprep.subr.mxu0 0.0
        %1551 = vmatpush1.msra.mxu0 0.0
        %1552 = vmatprep.subr.mxu0 0.0
        %1553 = vmatpush1.msra.mxu0 0.0
        %1554 = vmatprep.subr.mxu0 0.0
        %1555 = vmatpush1.msra.mxu0 0.0
        %1556 = vmatprep.subr.mxu0 0.0
        %1557 = vmatpush1.msra.mxu0 %v1519
        %1558 = vmatprep.subr.mxu0 0.0
        %1559 = vmatpush2.msra.mxu0 0.0
        %1560 = vmatprep.subr.mxu0 0.0
        %1561 = vmatpush2.msra.mxu0 0.0
        %1562 = vmatprep.subr.mxu0 0.0
        %1563 = vmatpush2.msra.mxu0 0.0
        %1564 = vmatprep.subr.mxu0 0.0
        %1565 = vmatpush2.msra.mxu0 0.0
        %1566 = vmatprep.subr.mxu0 0.0
        %1567 = vmatpush2.msra.mxu0 0.0
        %1568 = vmatprep.subr.mxu0 0.0
        %1569 = vmatpush2.msra.mxu0 0.0
        %1570 = vmatprep.subr.mxu0 0.0
        %1571 = vmatpush2.msra.mxu0 0.0
        %1572 = vmatprep.subr.mxu0 0.0
        %1573 = vmatpush2.msra.mxu0 0.0
        %1574 = vmatprep.subr.mxu0 0.0
        %1575 = vmatpush2.msra.mxu0 0.0
        %1576 = vmatprep.subr.mxu0 0.0
        %1577 = vmatpush2.msra.mxu0 0.0
        %1578 = vmatprep.subr.mxu0 0.0
        %1579 = vmatpush2.msra.mxu0 0.0
        %1580 = vmatprep.subr.mxu0 0.0
        %1581 = vmatpush2.msra.mxu0 0.0
        %1582 = vmatprep.subr.mxu0 0.0
        %1583 = vmatpush2.msra.mxu0 0.0
        %1584 = vmatprep.subr.mxu0 0.0
        %1585 = vmatpush2.msra.mxu0 0.0
        %1586 = vmatprep.subr.mxu0 0.0
        %1587 = vmatpush2.msra.mxu0 0.0
        %1588 = vmatprep.subr.mxu0 0.0
        %1589 = vmatpush2.msra.mxu0 0.0
        %1590 = vmatprep.mubr.f32.mxu0 0.0
        %1591 = vmatmul.mubr.f32.gmra.mxu0 %v1524
        %v1592 = vpop.f32.mrf.mxu0
        %v1593 = vadd.f32 0.0, %v1592
        %v1594 = vpop.f32.mrf.mxu0
        %1595 = vdwg.mxu0
        %v1597 = vsel %vm1170, %v1516, 0
        %1599 = vmatprep.subr.mxu0 0.0
        %1600 = vmatpush1.msra.mxu0 0.0
        %1601 = vmatprep.subr.mxu0 0.0
        %1602 = vmatpush1.msra.mxu0 0.0
        %1603 = vmatprep.subr.mxu0 0.0
        %1604 = vmatpush1.msra.mxu0 0.0
        %1605 = vmatprep.subr.mxu0 0.0
        %1606 = vmatpush1.msra.mxu0 0.0
        %1607 = vmatprep.subr.mxu0 0.0
        %1608 = vmatpush1.msra.mxu0 0.0
        %1609 = vmatprep.subr.mxu0 0.0
        %1610 = vmatpush1.msra.mxu0 0.0
        %1611 = vmatprep.subr.mxu0 0.0
        %1612 = vmatpush1.msra.mxu0 0.0
        %1613 = vmatprep.subr.mxu0 0.0
        %1614 = vmatpush1.msra.mxu0 0.0
        %1615 = vmatprep.subr.mxu0 0.0
        %1616 = vmatpush1.msra.mxu0 0.0
        %1617 = vmatprep.subr.mxu0 0.0
        %1618 = vmatpush1.msra.mxu0 0.0
        %1619 = vmatprep.subr.mxu0 0.0
        %1620 = vmatpush1.msra.mxu0 0.0
        %1621 = vmatprep.subr.mxu0 0.0
        %1622 = vmatpush1.msra.mxu0 0.0
        %1623 = vmatprep.subr.mxu0 0.0
        %1624 = vmatpush1.msra.mxu0 0.0
        %1625 = vmatprep.subr.mxu0 0.0
        %1626 = vmatpush1.msra.mxu0 0.0
        %1627 = vmatprep.subr.mxu0 0.0
        %1628 = vmatpush1.msra.mxu0 0.0
        %1629 = vmatprep.subr.mxu0 0.0
        %1630 = vmatpush1.msra.mxu0 %v1520
        %1631 = vmatprep.subr.mxu0 0.0
        %1632 = vmatpush2.msra.mxu0 0.0
        %1633 = vmatprep.subr.mxu0 0.0
        %1634 = vmatpush2.msra.mxu0 0.0
        %1635 = vmatprep.subr.mxu0 0.0
        %1636 = vmatpush2.msra.mxu0 0.0
        %1637 = vmatprep.subr.mxu0 0.0
        %1638 = vmatpush2.msra.mxu0 0.0
        %1639 = vmatprep.subr.mxu0 0.0
        %1640 = vmatpush2.msra.mxu0 0.0
        %1641 = vmatprep.subr.mxu0 0.0
        %1642 = vmatpush2.msra.mxu0 0.0
        %1643 = vmatprep.subr.mxu0 0.0
        %1644 = vmatpush2.msra.mxu0 0.0
        %1645 = vmatprep.subr.mxu0 0.0
        %1646 = vmatpush2.msra.mxu0 0.0
        %1647 = vmatprep.subr.mxu0 0.0
        %1648 = vmatpush2.msra.mxu0 0.0
        %1649 = vmatprep.subr.mxu0 0.0
        %1650 = vmatpush2.msra.mxu0 0.0
        %1651 = vmatprep.subr.mxu0 0.0
        %1652 = vmatpush2.msra.mxu0 0.0
        %1653 = vmatprep.subr.mxu0 0.0
        %1654 = vmatpush2.msra.mxu0 0.0
        %1655 = vmatprep.subr.mxu0 0.0
        %1656 = vmatpush2.msra.mxu0 0.0
        %1657 = vmatprep.subr.mxu0 0.0
        %1658 = vmatpush2.msra.mxu0 0.0
        %1659 = vmatprep.subr.mxu0 0.0
        %1660 = vmatpush2.msra.mxu0 0.0
        %1661 = vmatprep.subr.mxu0 0.0
        %1662 = vmatpush2.msra.mxu0 0.0
        %1663 = vmatprep.mubr.f32.mxu0 0.0
        %1664 = vmatmul.mubr.f32.gmra.mxu0 %v1597
        %v1665 = vpop.f32.mrf.mxu0
        %v1666 = vadd.f32 0.0, %v1665
        %v1667 = vpop.f32.mrf.mxu0
        %1668 = vdwg.mxu0
        %v1670 = vsel %vm1170, %v1517, 0
        %1672 = vmatprep.subr.mxu0 0.0
        %1673 = vmatpush1.msra.mxu0 0.0
        %1674 = vmatprep.subr.mxu0 0.0
        %1675 = vmatpush1.msra.mxu0 0.0
        %1676 = vmatprep.subr.mxu0 0.0
        %1677 = vmatpush1.msra.mxu0 0.0
        %1678 = vmatprep.subr.mxu0 0.0
        %1679 = vmatpush1.msra.mxu0 0.0
        %1680 = vmatprep.subr.mxu0 0.0
        %1681 = vmatpush1.msra.mxu0 0.0
        %1682 = vmatprep.subr.mxu0 0.0
        %1683 = vmatpush1.msra.mxu0 0.0
        %1684 = vmatprep.subr.mxu0 0.0
        %1685 = vmatpush1.msra.mxu0 0.0
        %1686 = vmatprep.subr.mxu0 0.0
        %1687 = vmatpush1.msra.mxu0 0.0
        %1688 = vmatprep.subr.mxu0 0.0
        %1689 = vmatpush1.msra.mxu0 0.0
        %1690 = vmatprep.subr.mxu0 0.0
        %1691 = vmatpush1.msra.mxu0 0.0
        %1692 = vmatprep.subr.mxu0 0.0
        %1693 = vmatpush1.msra.mxu0 0.0
        %1694 = vmatprep.subr.mxu0 0.0
        %1695 = vmatpush1.msra.mxu0 0.0
        %1696 = vmatprep.subr.mxu0 0.0
        %1697 = vmatpush1.msra.mxu0 0.0
        %1698 = vmatprep.subr.mxu0 0.0
        %1699 = vmatpush1.msra.mxu0 0.0
        %1700 = vmatprep.subr.mxu0 0.0
        %1701 = vmatpush1.msra.mxu0 0.0
        %1702 = vmatprep.subr.mxu0 0.0
        %1703 = vmatpush1.msra.mxu0 %v1521
        %1704 = vmatprep.subr.mxu0 0.0
        %1705 = vmatpush2.msra.mxu0 0.0
        %1706 = vmatprep.subr.mxu0 0.0
        %1707 = vmatpush2.msra.mxu0 0.0
        %1708 = vmatprep.subr.mxu0 0.0
        %1709 = vmatpush2.msra.mxu0 0.0
        %1710 = vmatprep.subr.mxu0 0.0
        %1711 = vmatpush2.msra.mxu0 0.0
        %1712 = vmatprep.subr.mxu0 0.0
        %1713 = vmatpush2.msra.mxu0 0.0
        %1714 = vmatprep.subr.mxu0 0.0
        %1715 = vmatpush2.msra.mxu0 0.0
        %1716 = vmatprep.subr.mxu0 0.0
        %1717 = vmatpush2.msra.mxu0 0.0
        %1718 = vmatprep.subr.mxu0 0.0
        %1719 = vmatpush2.msra.mxu0 0.0
        %1720 = vmatprep.subr.mxu0 0.0
        %1721 = vmatpush2.msra.mxu0 0.0
        %1722 = vmatprep.subr.mxu0 0.0
        %1723 = vmatpush2.msra.mxu0 0.0
        %1724 = vmatprep.subr.mxu0 0.0
        %1725 = vmatpush2.msra.mxu0 0.0
        %1726 = vmatprep.subr.mxu0 0.0
        %1727 = vmatpush2.msra.mxu0 0.0
        %1728 = vmatprep.subr.mxu0 0.0
        %1729 = vmatpush2.msra.mxu0 0.0
        %1730 = vmatprep.subr.mxu0 0.0
        %1731 = vmatpush2.msra.mxu0 0.0
        %1732 = vmatprep.subr.mxu0 0.0
        %1733 = vmatpush2.msra.mxu0 0.0
        %1734 = vmatprep.subr.mxu0 0.0
        %1735 = vmatpush2.msra.mxu0 0.0
        %1736 = vmatprep.mubr.f32.mxu0 0.0
        %1737 = vmatmul.mubr.f32.gmra.mxu0 %v1670
        %v1738 = vpop.f32.mrf.mxu0
        %v1739 = vadd.f32 0.0, %v1738
        %v1740 = vpop.f32.mrf.mxu0
        %1741 = vdwg.mxu0
        %v1743 = vsel %vm1170, %v1518, 0
        %1745 = vmatprep.subr.mxu0 0.0
        %1746 = vmatpush1.msra.mxu0 0.0
        %1747 = vmatprep.subr.mxu0 0.0
        %1748 = vmatpush1.msra.mxu0 0.0
        %1749 = vmatprep.subr.mxu0 0.0
        %1750 = vmatpush1.msra.mxu0 0.0
        %1751 = vmatprep.subr.mxu0 0.0
        %1752 = vmatpush1.msra.mxu0 0.0
        %1753 = vmatprep.subr.mxu0 0.0
        %1754 = vmatpush1.msra.mxu0 0.0
        %1755 = vmatprep.subr.mxu0 0.0
        %1756 = vmatpush1.msra.mxu0 0.0
        %1757 = vmatprep.subr.mxu0 0.0
        %1758 = vmatpush1.msra.mxu0 0.0
        %1759 = vmatprep.subr.mxu0 0.0
        %1760 = vmatpush1.msra.mxu0 0.0
        %1761 = vmatprep.subr.mxu0 0.0
        %1762 = vmatpush1.msra.mxu0 0.0
        %1763 = vmatprep.subr.mxu0 0.0
        %1764 = vmatpush1.msra.mxu0 0.0
        %1765 = vmatprep.subr.mxu0 0.0
        %1766 = vmatpush1.msra.mxu0 0.0
        %1767 = vmatprep.subr.mxu0 0.0
        %1768 = vmatpush1.msra.mxu0 0.0
        %1769 = vmatprep.subr.mxu0 0.0
        %1770 = vmatpush1.msra.mxu0 0.0
        %1771 = vmatprep.subr.mxu0 0.0
        %1772 = vmatpush1.msra.mxu0 0.0
        %1773 = vmatprep.subr.mxu0 0.0
        %1774 = vmatpush1.msra.mxu0 0.0
        %1775 = vmatprep.subr.mxu0 0.0
        %1776 = vmatpush1.msra.mxu0 %v1522
        %1777 = vmatprep.subr.mxu0 0.0
        %1778 = vmatpush2.msra.mxu0 0.0
        %1779 = vmatprep.subr.mxu0 0.0
        %1780 = vmatpush2.msra.mxu0 0.0
        %1781 = vmatprep.subr.mxu0 0.0
        %1782 = vmatpush2.msra.mxu0 0.0
        %1783 = vmatprep.subr.mxu0 0.0
        %1784 = vmatpush2.msra.mxu0 0.0
        %1785 = vmatprep.subr.mxu0 0.0
        %1786 = vmatpush2.msra.mxu0 0.0
        %1787 = vmatprep.subr.mxu0 0.0
        %1788 = vmatpush2.msra.mxu0 0.0
        %1789 = vmatprep.subr.mxu0 0.0
        %1790 = vmatpush2.msra.mxu0 0.0
        %1791 = vmatprep.subr.mxu0 0.0
        %1792 = vmatpush2.msra.mxu0 0.0
        %1793 = vmatprep.subr.mxu0 0.0
        %1794 = vmatpush2.msra.mxu0 0.0
        %1795 = vmatprep.subr.mxu0 0.0
        %1796 = vmatpush2.msra.mxu0 0.0
        %1797 = vmatprep.subr.mxu0 0.0
        %1798 = vmatpush2.msra.mxu0 0.0
        %1799 = vmatprep.subr.mxu0 0.0
        %1800 = vmatpush2.msra.mxu0 0.0
        %1801 = vmatprep.subr.mxu0 0.0
        %1802 = vmatpush2.msra.mxu0 0.0
        %1803 = vmatprep.subr.mxu0 0.0
        %1804 = vmatpush2.msra.mxu0 0.0
        %1805 = vmatprep.subr.mxu0 0.0
        %1806 = vmatpush2.msra.mxu0 0.0
        %1807 = vmatprep.subr.mxu0 0.0
        %1808 = vmatpush2.msra.mxu0 0.0
        %1809 = vmatprep.mubr.f32.mxu0 0.0
        %1810 = vmatmul.mubr.f32.gmra.mxu0 %v1743
        %v1811 = vpop.f32.mrf.mxu0
        %v1812 = vadd.f32 0.0, %v1811
        %v1813 = vpop.f32.mrf.mxu0
        %1814 = vdwg.mxu0
        %v1815 = vcombine.low %v1593, %v1739
        %v1816 = vcombine.high %v1593, %v1739
        %v1818 = vunpack.c.l.s4 1983009808
        %v1819 = vunpack.c.0.s8 %v1818
        %v1820 = vlaneseq
        %v1821 = vshrl.u32 %v1820, 7
        %v1822 = vsub.s32 %v1819, %v1821
        %v1823 = vrot.slane %v1815, %v1822
        %v1825 = vunpack.c.l.s4 1983009808
        %v1826 = vunpack.c.0.s8 %v1825
        %v1827 = vlaneseq
        %v1828 = vshrl.u32 %v1827, 7
        %v1829 = vsub.s32 %v1826, %v1828
        %v1830 = vrot.slane %v1816, %v1829
        %v1831 = vcombine.low %v1666, %v1812
        %v1832 = vcombine.high %v1666, %v1812
        %v1834 = vunpack.c.l.s4 1983009808
        %v1835 = vunpack.c.0.s8 %v1834
        %v1836 = vlaneseq
        %v1837 = vshrl.u32 %v1836, 7
        %v1838 = vsub.s32 %v1835, %v1837
        %v1839 = vrot.slane %v1831, %v1838
        %v1841 = vunpack.c.l.s4 1983009808
        %v1842 = vunpack.c.0.s8 %v1841
        %v1843 = vlaneseq
        %v1844 = vshrl.u32 %v1843, 7
        %v1845 = vsub.s32 %v1842, %v1844
        %v1846 = vrot.slane %v1832, %v1845
        %v1847 = vcombine.low %v1823, %v1839
        %v1848 = vcombine.high %v1823, %v1839
        %v1850 = vunpack.c.l.s4 1934713408
        %v1851 = vunpack.c.0.s8 %v1850
        %v1852 = vlaneseq
        %v1853 = vshrl.u32 %v1852, 7
        %v1854 = vsub.s32 %v1851, %v1853
        %v1855 = vrot.slane %v1847, %v1854
        %v1857 = vunpack.c.l.s4 1934713408
        %v1858 = vunpack.c.0.s8 %v1857
        %v1859 = vlaneseq
        %v1860 = vshrl.u32 %v1859, 7
        %v1861 = vsub.s32 %v1858, %v1860
        %v1862 = vrot.slane %v1848, %v1861
        %v1863 = vcombine.low %v1830, %v1846
        %v1864 = vcombine.high %v1830, %v1846
        %v1866 = vunpack.c.l.s4 1934713408
        %v1867 = vunpack.c.0.s8 %v1866
        %v1868 = vlaneseq
        %v1869 = vshrl.u32 %v1868, 7
        %v1870 = vsub.s32 %v1867, %v1869
        %v1871 = vrot.slane %v1863, %v1870
        %v1873 = vunpack.c.l.s4 1934713408
        %v1874 = vunpack.c.0.s8 %v1873
        %v1875 = vlaneseq
        %v1876 = vshrl.u32 %v1875, 7
        %v1877 = vsub.s32 %v1874, %v1876
        %v1878 = vrot.slane %v1864, %v1877
        %v1879 = vcombine.high %v1855, 0.0
        %v1880 = vcombine.high %v1862, 0.0
        %v1881 = vcombine.high %v1871, 0.0
        %v1882 = vcombine.high %v1878, 0.0
        %v1883 = vcombine.low %v1855, %v1862
        %v1885 = vunpack.c.l.s4 1983009808
        %v1886 = vunpack.c.0.s8 %v1885
        %v1887 = vlaneseq
        %v1888 = vshrl.u32 %v1887, 7
        %v1889 = vsub.s32 %v1886, %v1888
        %v1890 = vrot.slane %v1883, %v1889
        %v1891 = vcombine.low %v1879, %v1880
        %v1893 = vunpack.c.l.s4 1983009808
        %v1894 = vunpack.c.0.s8 %v1893
        %v1895 = vlaneseq
        %v1896 = vshrl.u32 %v1895, 7
        %v1897 = vsub.s32 %v1894, %v1896
        %v1898 = vrot.slane %v1891, %v1897
        %v1899 = vcombine.low %v1871, %v1878
        %v1901 = vunpack.c.l.s4 1983009808
        %v1902 = vunpack.c.0.s8 %v1901
        %v1903 = vlaneseq
        %v1904 = vshrl.u32 %v1903, 7
        %v1905 = vsub.s32 %v1902, %v1904
        %v1906 = vrot.slane %v1899, %v1905
        %v1907 = vcombine.low %v1881, %v1882
        %v1909 = vunpack.c.l.s4 1983009808
        %v1910 = vunpack.c.0.s8 %v1909
        %v1911 = vlaneseq
        %v1912 = vshrl.u32 %v1911, 7
        %v1913 = vsub.s32 %v1910, %v1912
        %v1914 = vrot.slane %v1907, %v1913
        %v1915 = vcombine.low %v1890, %v1898
        %v1916 = vcombine.high %v1890, %v1898
        %v1918 = vunpack.c.l.s4 1934713408
        %v1919 = vunpack.c.0.s8 %v1918
        %v1920 = vlaneseq
        %v1921 = vshrl.u32 %v1920, 7
        %v1922 = vsub.s32 %v1919, %v1921
        %v1923 = vrot.slane %v1915, %v1922
        %v1925 = vunpack.c.l.s4 1934713408
        %v1926 = vunpack.c.0.s8 %v1925
        %v1927 = vlaneseq
        %v1928 = vshrl.u32 %v1927, 7
        %v1929 = vsub.s32 %v1926, %v1928
        %v1930 = vrot.slane %v1916, %v1929
        %v1931 = vcombine.low %v1906, %v1914
        %v1932 = vcombine.high %v1906, %v1914
        %v1934 = vunpack.c.l.s4 1934713408
        %v1935 = vunpack.c.0.s8 %v1934
        %v1936 = vlaneseq
        %v1937 = vshrl.u32 %v1936, 7
        %v1938 = vsub.s32 %v1935, %v1937
        %v1939 = vrot.slane %v1931, %v1938
        %v1941 = vunpack.c.l.s4 1934713408
        %v1942 = vunpack.c.0.s8 %v1941
        %v1943 = vlaneseq
        %v1944 = vshrl.u32 %v1943, 7
        %v1945 = vsub.s32 %v1942, %v1944
        %v1946 = vrot.slane %v1932, %v1945
        %v1947 = vcombine.low %v1923, %v1939
        %v1948 = vcombine.high %v1923, %v1939
        %v1949 = vcombine.low %v1930, %v1946
        %v1950 = vcombine.high %v1930, %v1946
        %1952 = vrot.lane.b32.xlu0 %v1948, 8
        %v1953 = vpop.permute.xlu0 %1952
        %1956 = vrot.lane.b32.xlu0 %v1949, 16
        %v1957 = vpop.permute.xlu0 %1956
        %1960 = vrot.lane.b32.xlu0 %v1950, 24
        %v1961 = vpop.permute.xlu0 %1960
        %v1963 = vsel %vm1170, %v1947, %v1953
        %vm1964 = vcmask 130048
        %v1965 = vsel %vm1964, %v1963, %v1957
        %vm1966 = vcmask 195584
        %v1967 = vsel %vm1966, %v1965, %v1961
        %v1968 = vld [vmem:[%s5] sm:$0xff]
        %v1969 = vld [vmem:[%s5 + $0x8] sm:$0xff]
        %v1970 = vld [vmem:[%s5 + $0x10] sm:$0xff]
        %v1971 = vld [vmem:[%s5 + $0x18] sm:$0xff]
        %v1972 = vld [vmem:[%s6] sm:$0x1]
        %v1974 = vlaneseq
        %v1975 = vshrl.u32 %v1974, 7
        %v1976 = vsub.s32 0, %v1975
        %v1977 = vrot.slane %v1972, %v1976
        %v1980 = vsel %vm946, %v1967, 0
        %1982 = vmatprep.subr.mxu0 0.0
        %1983 = vmatpush1.msra.mxu0 0.0
        %1984 = vmatprep.subr.mxu0 0.0
        %1985 = vmatpush1.msra.mxu0 0.0
        %1986 = vmatprep.subr.mxu0 0.0
        %1987 = vmatpush1.msra.mxu0 0.0
        %1988 = vmatprep.subr.mxu0 0.0
        %1989 = vmatpush1.msra.mxu0 0.0
        %1990 = vmatprep.subr.mxu0 0.0
        %1991 = vmatpush1.msra.mxu0 0.0
        %1992 = vmatprep.subr.mxu0 0.0
        %1993 = vmatpush1.msra.mxu0 0.0
        %1994 = vmatprep.subr.mxu0 0.0
        %1995 = vmatpush1.msra.mxu0 0.0
        %1996 = vmatprep.subr.mxu0 0.0
        %1997 = vmatpush1.msra.mxu0 0.0
        %1998 = vmatprep.subr.mxu0 0.0
        %1999 = vmatpush1.msra.mxu0 0.0
        %2000 = vmatprep.subr.mxu0 0.0
        %2001 = vmatpush1.msra.mxu0 0.0
        %2002 = vmatprep.subr.mxu0 0.0
        %2003 = vmatpush1.msra.mxu0 0.0
        %2004 = vmatprep.subr.mxu0 0.0
        %2005 = vmatpush1.msra.mxu0 0.0
        %2006 = vmatprep.subr.mxu0 0.0
        %2007 = vmatpush1.msra.mxu0 %v1971
        %2008 = vmatprep.subr.mxu0 0.0
        %2009 = vmatpush1.msra.mxu0 %v1970
        %2010 = vmatprep.subr.mxu0 0.0
        %2011 = vmatpush1.msra.mxu0 %v1969
        %2012 = vmatprep.subr.mxu0 0.0
        %2013 = vmatpush1.msra.mxu0 %v1968
        %2014 = vmatprep.subr.mxu0 0.0
        %2015 = vmatpush2.msra.mxu0 0.0
        %2016 = vmatprep.subr.mxu0 0.0
        %2017 = vmatpush2.msra.mxu0 0.0
        %2018 = vmatprep.subr.mxu0 0.0
        %2019 = vmatpush2.msra.mxu0 0.0
        %2020 = vmatprep.subr.mxu0 0.0
        %2021 = vmatpush2.msra.mxu0 0.0
        %2022 = vmatprep.subr.mxu0 0.0
        %2023 = vmatpush2.msra.mxu0 0.0
        %2024 = vmatprep.subr.mxu0 0.0
        %2025 = vmatpush2.msra.mxu0 0.0
        %2026 = vmatprep.subr.mxu0 0.0
        %2027 = vmatpush2.msra.mxu0 0.0
        %2028 = vmatprep.subr.mxu0 0.0
        %2029 = vmatpush2.msra.mxu0 0.0
        %2030 = vmatprep.subr.mxu0 0.0
        %2031 = vmatpush2.msra.mxu0 0.0
        %2032 = vmatprep.subr.mxu0 0.0
        %2033 = vmatpush2.msra.mxu0 0.0
        %2034 = vmatprep.subr.mxu0 0.0
        %2035 = vmatpush2.msra.mxu0 0.0
        %2036 = vmatprep.subr.mxu0 0.0
        %2037 = vmatpush2.msra.mxu0 0.0
        %2038 = vmatprep.subr.mxu0 0.0
        %2039 = vmatpush2.msra.mxu0 0.0
        %2040 = vmatprep.subr.mxu0 0.0
        %2041 = vmatpush2.msra.mxu0 0.0
        %2042 = vmatprep.subr.mxu0 0.0
        %2043 = vmatpush2.msra.mxu0 0.0
        %2044 = vmatprep.subr.mxu0 0.0
        %2045 = vmatpush2.msra.mxu0 0.0
        %2046 = vmatprep.mubr.f32.mxu0 0.0
        %2047 = vmatmul.mubr.f32.gmra.mxu0 %v1980
        %v2048 = vpop.f32.mrf.mxu0
        %v2049 = vadd.f32 %v1977, %v2048
        %v2050 = vpop.f32.mrf.mxu0
        %2051 = vdwg.mxu0
        %v2052 = vadd.f32 %v934, %v2049
        %v2053 = vsel %vm946, %v2052, 0.0
        %2054 = vadd.xlane.f32.xlu0 %v2053
        %v2055 = vpop.xlane.xlu0 %2054
        %v2056 = vrcp.pop 32.0
        %v2057 = vmul.f32 %v2055, %v2056
        %v2058 = vsub.f32 %v2052, %v2057
        %v2059 = vmul.f32 %v2058, %v2058
        %v2060 = vsel %vm946, %v2059, 0.0
        %2061 = vadd.xlane.f32.xlu0 %v2060
        %v2062 = vpop.xlane.xlu0 %2061
        %v2063 = vmul.f32 %v2062, %v2056
        %v2064 = vadd.f32 %v2063, 1e-05
        %v2065 = vrsqrt.pop %v2064
        %v2066 = vmul.f32 %v2058, %v2065
        %v2067 = vld [vmem:[%s11] sm:$0x1]
        %v2069 = vlaneseq
        %v2070 = vshrl.u32 %v2069, 7
        %v2071 = vsub.s32 0, %v2070
        %v2072 = vrot.slane %v2067, %v2071
        %v2074 = vmul.f32 %v2066, %v2072
        %v2075 = vld [vmem:[%s12] sm:$0x1]
        %v2077 = vlaneseq
        %v2078 = vshrl.u32 %v2077, 7
        %v2079 = vsub.s32 0, %v2078
        %v2080 = vrot.slane %v2075, %v2079
        %v2082 = vadd.f32 %v2074, %v2080
        %v2083 = vld [vmem:[#allocation7] sm:$0xff]
        %v2084 = vld [vmem:[#allocation7 + $0x8] sm:$0xff]
        %v2085 = vld [vmem:[#allocation7 + $0x10] sm:$0xff]
        %v2086 = vld [vmem:[#allocation7 + $0x18] sm:$0xff]
        %v2087 = vld [vmem:[%s8] sm:$0x1]
        %v2089 = vlaneseq
        %v2090 = vshrl.u32 %v2089, 7
        %v2091 = vsub.s32 0, %v2090
        %v2092 = vrot.slane %v2087, %v2091
        %v2095 = vsel %vm946, %v2082, 0
        %2097 = vmatprep.subr.mxu0 0.0
        %2098 = vmatpush1.msra.mxu0 0.0
        %2099 = vmatprep.subr.mxu0 0.0
        %2100 = vmatpush1.msra.mxu0 0.0
        %2101 = vmatprep.subr.mxu0 0.0
        %2102 = vmatpush1.msra.mxu0 0.0
        %2103 = vmatprep.subr.mxu0 0.0
        %2104 = vmatpush1.msra.mxu0 0.0
        %2105 = vmatprep.subr.mxu0 0.0
        %2106 = vmatpush1.msra.mxu0 0.0
        %2107 = vmatprep.subr.mxu0 0.0
        %2108 = vmatpush1.msra.mxu0 0.0
        %2109 = vmatprep.subr.mxu0 0.0
        %2110 = vmatpush1.msra.mxu0 0.0
        %2111 = vmatprep.subr.mxu0 0.0
        %2112 = vmatpush1.msra.mxu0 0.0
        %2113 = vmatprep.subr.mxu0 0.0
        %2114 = vmatpush1.msra.mxu0 0.0
        %2115 = vmatprep.subr.mxu0 0.0
        %2116 = vmatpush1.msra.mxu0 0.0
        %2117 = vmatprep.subr.mxu0 0.0
        %2118 = vmatpush1.msra.mxu0 0.0
        %2119 = vmatprep.subr.mxu0 0.0
        %2120 = vmatpush1.msra.mxu0 0.0
        %2121 = vmatprep.subr.mxu0 0.0
        %2122 = vmatpush1.msra.mxu0 %v2086
        %2123 = vmatprep.subr.mxu0 0.0
        %2124 = vmatpush1.msra.mxu0 %v2085
        %2125 = vmatprep.subr.mxu0 0.0
        %2126 = vmatpush1.msra.mxu0 %v2084
        %2127 = vmatprep.subr.mxu0 0.0
        %2128 = vmatpush1.msra.mxu0 %v2083
        %2129 = vmatprep.subr.mxu0 0.0
        %2130 = vmatpush2.msra.mxu0 0.0
        %2131 = vmatprep.subr.mxu0 0.0
        %2132 = vmatpush2.msra.mxu0 0.0
        %2133 = vmatprep.subr.mxu0 0.0
        %2134 = vmatpush2.msra.mxu0 0.0
        %2135 = vmatprep.subr.mxu0 0.0
        %2136 = vmatpush2.msra.mxu0 0.0
        %2137 = vmatprep.subr.mxu0 0.0
        %2138 = vmatpush2.msra.mxu0 0.0
        %2139 = vmatprep.subr.mxu0 0.0
        %2140 = vmatpush2.msra.mxu0 0.0
        %2141 = vmatprep.subr.mxu0 0.0
        %2142 = vmatpush2.msra.mxu0 0.0
        %2143 = vmatprep.subr.mxu0 0.0
        %2144 = vmatpush2.msra.mxu0 0.0
        %2145 = vmatprep.subr.mxu0 0.0
        %2146 = vmatpush2.msra.mxu0 0.0
        %2147 = vmatprep.subr.mxu0 0.0
        %2148 = vmatpush2.msra.mxu0 0.0
        %2149 = vmatprep.subr.mxu0 0.0
        %2150 = vmatpush2.msra.mxu0 0.0
        %2151 = vmatprep.subr.mxu0 0.0
        %2152 = vmatpush2.msra.mxu0 0.0
        %2153 = vmatprep.subr.mxu0 0.0
        %2154 = vmatpush2.msra.mxu0 0.0
        %2155 = vmatprep.subr.mxu0 0.0
        %2156 = vmatpush2.msra.mxu0 0.0
        %2157 = vmatprep.subr.mxu0 0.0
        %2158 = vmatpush2.msra.mxu0 0.0
        %2159 = vmatprep.subr.mxu0 0.0
        %2160 = vmatpush2.msra.mxu0 0.0
        %2161 = vmatprep.mubr.f32.mxu0 0.0
        %2162 = vmatmul.mubr.f32.gmra.mxu0 %v2095
        %v2163 = vpop.f32.mrf.mxu0
        %v2164 = vadd.f32 %v2092, %v2163
        %v2165 = vpop.f32.mrf.mxu0
        %2166 = vdwg.mxu0
        %v2167 = vmax.f32 %v2164, 0.0
        %v2168 = vld [vmem:[%s9] sm:$0xff]
        %v2169 = vld [vmem:[%s9 + $0x8] sm:$0xff]
        %v2170 = vld [vmem:[%s9 + $0x10] sm:$0xff]
        %v2171 = vld [vmem:[%s9 + $0x18] sm:$0xff]
        %v2172 = vld [vmem:[%s9 + $0x20] sm:$0xff]
        %v2173 = vld [vmem:[%s9 + $0x28] sm:$0xff]
        %v2174 = vld [vmem:[%s9 + $0x30] sm:$0xff]
        %v2175 = vld [vmem:[%s9 + $0x38] sm:$0xff]
        %v2176 = vld [vmem:[%s10] sm:$0x1]
        %v2178 = vlaneseq
        %v2179 = vshrl.u32 %v2178, 7
        %v2180 = vsub.s32 0, %v2179
        %v2181 = vrot.slane %v2176, %v2180
        %vm2183 = vcmask 523264
        %v2185 = vsel %vm2183, %v2167, 0
        %2187 = vmatprep.subr.mxu0 0.0
        %2188 = vmatpush1.msra.mxu0 0.0
        %2189 = vmatprep.subr.mxu0 0.0
        %2190 = vmatpush1.msra.mxu0 0.0
        %2191 = vmatprep.subr.mxu0 0.0
        %2192 = vmatpush1.msra.mxu0 0.0
        %2193 = vmatprep.subr.mxu0 0.0
        %2194 = vmatpush1.msra.mxu0 0.0
        %2195 = vmatprep.subr.mxu0 0.0
        %2196 = vmatpush1.msra.mxu0 0.0
        %2197 = vmatprep.subr.mxu0 0.0
        %2198 = vmatpush1.msra.mxu0 0.0
        %2199 = vmatprep.subr.mxu0 0.0
        %2200 = vmatpush1.msra.mxu0 0.0
        %2201 = vmatprep.subr.mxu0 0.0
        %2202 = vmatpush1.msra.mxu0 0.0
        %2203 = vmatprep.subr.mxu0 0.0
        %2204 = vmatpush1.msra.mxu0 %v2175
        %2205 = vmatprep.subr.mxu0 0.0
        %2206 = vmatpush1.msra.mxu0 %v2174
        %2207 = vmatprep.subr.mxu0 0.0
        %2208 = vmatpush1.msra.mxu0 %v2173
        %2209 = vmatprep.subr.mxu0 0.0
        %2210 = vmatpush1.msra.mxu0 %v2172
        %2211 = vmatprep.subr.mxu0 0.0
        %2212 = vmatpush1.msra.mxu0 %v2171
        %2213 = vmatprep.subr.mxu0 0.0
        %2214 = vmatpush1.msra.mxu0 %v2170
        %2215 = vmatprep.subr.mxu0 0.0
        %2216 = vmatpush1.msra.mxu0 %v2169
        %2217 = vmatprep.subr.mxu0 0.0
        %2218 = vmatpush1.msra.mxu0 %v2168
        %2219 = vmatprep.subr.mxu0 0.0
        %2220 = vmatpush2.msra.mxu0 0.0
        %2221 = vmatprep.subr.mxu0 0.0
        %2222 = vmatpush2.msra.mxu0 0.0
        %2223 = vmatprep.subr.mxu0 0.0
        %2224 = vmatpush2.msra.mxu0 0.0
        %2225 = vmatprep.subr.mxu0 0.0
        %2226 = vmatpush2.msra.mxu0 0.0
        %2227 = vmatprep.subr.mxu0 0.0
        %2228 = vmatpush2.msra.mxu0 0.0
        %2229 = vmatprep.subr.mxu0 0.0
        %2230 = vmatpush2.msra.mxu0 0.0
        %2231 = vmatprep.subr.mxu0 0.0
        %2232 = vmatpush2.msra.mxu0 0.0
        %2233 = vmatprep.subr.mxu0 0.0
        %2234 = vmatpush2.msra.mxu0 0.0
        %2235 = vmatprep.subr.mxu0 0.0
        %2236 = vmatpush2.msra.mxu0 0.0
        %2237 = vmatprep.subr.mxu0 0.0
        %2238 = vmatpush2.msra.mxu0 0.0
        %2239 = vmatprep.subr.mxu0 0.0
        %2240 = vmatpush2.msra.mxu0 0.0
        %2241 = vmatprep.subr.mxu0 0.0
        %2242 = vmatpush2.msra.mxu0 0.0
        %2243 = vmatprep.subr.mxu0 0.0
        %2244 = vmatpush2.msra.mxu0 0.0
        %2245 = vmatprep.subr.mxu0 0.0
        %2246 = vmatpush2.msra.mxu0 0.0
        %2247 = vmatprep.subr.mxu0 0.0
        %2248 = vmatpush2.msra.mxu0 0.0
        %2249 = vmatprep.subr.mxu0 0.0
        %2250 = vmatpush2.msra.mxu0 0.0
        %2251 = vmatprep.mubr.f32.mxu0 0.0
        %2252 = vmatmul.mubr.f32.gmra.mxu0 %v2185
        %v2253 = vpop.f32.mrf.mxu0
        %v2254 = vadd.f32 %v2181, %v2253
        %v2255 = vpop.f32.mrf.mxu0
        %2256 = vdwg.mxu0
        %v2257 = vadd.f32 %v2082, %v2254
        %v2258 = vsel %vm946, %v2257, 0.0
        %2259 = vadd.xlane.f32.xlu0 %v2258
        %v2260 = vpop.xlane.xlu0 %2259
        %v2261 = vmul.f32 %v2260, %v2056
        %v2262 = vsub.f32 %v2257, %v2261
        %v2263 = vmul.f32 %v2262, %v2262
        %v2264 = vsel %vm946, %v2263, 0.0
        %2265 = vadd.xlane.f32.xlu0 %v2264
        %v2266 = vpop.xlane.xlu0 %2265
        %v2267 = vmul.f32 %v2266, %v2056
        %v2268 = vadd.f32 %v2267, 1e-05
        %v2269 = vrsqrt.pop %v2268
        %v2270 = vmul.f32 %v2262, %v2269
        %v2271 = vld [vmem:[%s13] sm:$0x1]
        %v2273 = vlaneseq
        %v2274 = vshrl.u32 %v2273, 7
        %v2275 = vsub.s32 0, %v2274
        %v2276 = vrot.slane %v2271, %v2275
        %v2278 = vmul.f32 %v2270, %v2276
        %v2279 = vld [vmem:[%s14] sm:$0x1]
        %v2281 = vlaneseq
        %v2282 = vshrl.u32 %v2281, 7
        %v2283 = vsub.s32 0, %v2282
        %v2284 = vrot.slane %v2279, %v2283
        %v2286 = vadd.f32 %v2278, %v2284
        %2287 = vst.msk [vmem:[%s538] sm:$0xff] %vm946, %v2286
        %s2288 = sand.u32 %s375, 1
        %s2289 = scalar_lea.sflag [#allocation6], %s2288
        %s2290 = sand.u32 %s375, 1
        %s2291 = smul.addr %s2290, 8
        %s2292 = scalar_lea.vmem [#allocation9], %s2291
        // Predicated region
        $region93: #{tpu_custom_call.1} parent=79 // pred_check
          %p2293 = pneg %p385
        $region94: #{tpu_custom_call.1} parent=79 // pred_check_branch
          %2295 = sbr.rel (%p2293) target = $region96
        $region95: #{tpu_custom_call.1} parent=79 // pred_region
          %s2297 = ssub.s32 128, 128
          %2298 = vsyncadd %s2289, %s2297
          %s2299 = sadd.s32 %s38, %s37
          %s2300 = smul.addr %s2299, 128
          %s2301 = scalar_lea.hbm %s15, %s2300
          %s2303 = sshll.u32 %s2292, 4
          %s2304 = int_to_ptr.vmem [resolvable:$true] %s2303
          %2306 = dma.vmem_to_hbm [thread:$0]  %s2304, 128, %s2301, %s2289
        $region96: #{tpu_custom_call.1} parent=79 // pred_fallthru
          _
      $region80: #{tpu_custom_call.1} parent=5 // pred_fallthru
        _
      %p2307 = scmp.le.s32.totalorder 2, %s28
      // Predicated region
      $region97: #{tpu_custom_call.1} parent=5 // pred_check
        %p2308 = pneg %p2307
      $region98: #{tpu_custom_call.1} parent=5 // pred_check_branch
        %2310 = sbr.rel (%p2308) target = $region100
      $region99: #{tpu_custom_call.1} parent=5 // pred_region
        %s2311 = ssub.s32 %s28, 2
        // Predicated region
        $region101: #{tpu_custom_call.1} parent=99 // pred_check
          %p2312 = pneg %p391
        $region102: #{tpu_custom_call.1} parent=99 // pred_check_branch
          %2314 = sbr.rel (%p2312) target = $region104
        $region103: #{tpu_custom_call.1} parent=99 // pred_region
          %s2315 = sand.u32 %s376, 1
          %s2316 = scalar_lea.sflag [#allocation6], %s2315
          %s2317 = sand.u32 %s376, 1
          %s2318 = smul.addr %s2317, 8
          %s2319 = scalar_lea.vmem [#allocation9], %s2318
          %2320 = dma.done %s2316, 128
        $region104: #{tpu_custom_call.1} parent=99 // pred_fallthru
          _
      $region100: #{tpu_custom_call.1} parent=5 // pred_fallthru
        _
    $region6: #{tpu_custom_call.1} parent=1 // loop_footer
      %s32 = sadd.s32 1, %s28
    $region7: #{tpu_custom_call.1} parent=1 // loop_footer_branch
      %27 = sbr.rel target = $region3
    $region8: #{tpu_custom_call.1} parent=1 // loop_exit
      _
    %2321 = vsyncpa [#allocation5], 1
    %s2322 = scalar_lea.sflag [#allocation5], 1
    %2323 = vsyncpa %s2322, 1
    %2324 = vsyncpa [#allocation8], 1
    %2325 = vsyncpa [#allocation6], 1
    %s2326 = scalar_lea.sflag [#allocation6], 1
    %2327 = vsyncpa %s2326, 1

</llo_original>
